<compile_context>
chip_gen: v6e
topology: v6e:2x2x1
jax: 0.10.0
libtpu: 0.0.40
codegen_flags: <defaults>
</compile_context>

<pallas_src>
from functools import partial

import jax
import jax.numpy as jnp
from jax import lax
from jax.experimental import pallas as pl
from jax.experimental.pallas import tpu as pltpu


def duration_kernel(x_ref, h0_ref, c0_ref, wih_ref, whh_ref, b_ref,
                    w1_ref, b1_ref, w2_ref, b2_ref, out_ref,
                    *, seq_len, unroll_limit, matmul_dtype):
    H = h0_ref.shape[-1]
    D = x_ref.shape[-1]

    x = x_ref[...]                                   # (T, Bg, D)  f32
    wih = wih_ref[...]                               # (D, 4H)
    bias = b_ref[...]                                # (1, 4H) = b_ih + b_hh

    # ---- Hoisted input projection as D broadcast-FMAs on the VPU.
    #      K = D = 3 padded to 8 is an MXU-pathological matmul; doing it on the VPU
    #      keeps the MXU free so the recurrence can start immediately.
    gx = bias[None, :, :] + x[:, :, 0:1] * wih[0:1, :][None, :, :]
    for d in range(1, D):
        gx = gx + x[:, :, d:d + 1] * wih[d:d + 1, :][None, :, :]
    # gx: (T, Bg, 4H) f32 — the dominant VMEM tenant (bounded in the wrapper).

    # W_hh stays VMEM resident; cast once to the MXU operand dtype (f32 accumulation
    # is kept via preferred_element_type).
    whh = whh_ref[...].astype(matmul_dtype)          # (H, 4H)
    h = h0_ref[...]                                  # (Bg, H) f32
    c = c0_ref[...]                                  # (Bg, H) f32

    def step(gates_x, h, c):
        gates = gates_x + jnp.dot(h.astype(matmul_dtype), whh,
                                  preferred_element_type=jnp.float32)   # (Bg, 4H)
        # Full-width EUP passes over the single (8, 128) vreg, then aligned 32-lane
        # gate slices (should lower to lane selects, not VMEM copies).
        sig = jax.nn.sigmoid(gates)
        tnh = jnp.tanh(gates)
        i_g = sig[:, 0 * H:1 * H]
        f_g = sig[:, 1 * H:2 * H]
        g_g = tnh[:, 2 * H:3 * H]
        o_g = sig[:, 3 * H:4 * H]
        c_new = f_g * c + i_g * g_g
        h_new = o_g * jnp.tanh(c_new)
        return h_new, c_new

    # TODO(synk): drive the MXU explicitly (push W_hh once, acc per step) if Mosaic
    # re-loads the RHS every iteration.
    if seq_len <= unroll_limit:
        # Small static T: full unroll (LLO scheduler sees everything).
        for t in range(seq_len):
            h, c = step(gx[t], h, c)
    else:
        # Long T: bounded live ranges / instruction memory.
        def body(t, carry):
            h_c, c_c = carry
            g_t = lax.dynamic_index_in_dim(gx, t, axis=0, keepdims=False)
            return step(g_t, h_c, c_c)
        h, c = lax.fori_loop(0, seq_len, body, (h, c))

    # ---- Epilogue: output = tanh(fc2(relu(fc1(h_T))))
    z1 = jnp.dot(h.astype(matmul_dtype), w1_ref[...].astype(matmul_dtype),
                 preferred_element_type=jnp.float32) + b1_ref[...]       # (Bg, 24)
    z1 = jnp.maximum(z1, 0.0)
    # fc2 has a single output column: VPU multiply + lane reduce beats an N=1 MXU push.
    z2 = jnp.sum(z1 * w2_ref[...], axis=-1, keepdims=True) + b2_ref[...]  # (Bg, 1)
    # Output is tiny ((Bg,1) per program); lane-1 stores are negligible at this size.
    out_ref[...] = jnp.tanh(z2)


def duration_net_forward(x_btd, h0, c0, params, *, num_groups=1,
                         matmul_dtype=jnp.bfloat16, unroll_limit=16):
    """x_btd: (B, T, D) float32 (batch_first like PyTorch). h0, c0: (1, B, H).
       Returns (1, B, 1) = tanh(fc2(relu(fc1(h_T)))).

       num_groups splits the batch into independent groups mapped to a 'parallel'
       grid axis (lets v7x use both TensorCores); the LSTM is batch-independent so
       this is semantics-preserving."""
    B, T, D = x_btd.shape
    H = h0.shape[-1]
    FC1 = params["w1"].shape[-1]

    assert B % num_groups == 0, "num_groups must divide the batch"
    Bg = B // num_groups
    assert Bg % 8 == 0 or num_groups == 1, "per-group batch must be a multiple of 8"

    # Time-major so each program's x block is (T, Bg, D).
    x_tbd = jnp.transpose(x_btd, (1, 0, 2))          # (T, B, D)
    h0_2d = h0[0]                                    # (B, H)
    c0_2d = c0[0]

    wih = params["wih"]                              # (D, 4H)  = W_ih^T
    whh = params["whh"]                              # (H, 4H)  = W_hh^T
    b = params["b"]                                  # (1, 4H)  = b_ih + b_hh
    w1 = params["w1"]                                # (H, 24)  = fc1.weight^T
    b1 = params["b1"]                                # (1, 24)
    w2 = params["w2"]                                # (1, 24)  = fc2.weight (torch layout)
    b2 = params["b2"]                                # (1, 1)

    # VMEM budget: bound gx (dominant) + double-buffered input blocks.
    vmem_limit = 32 * 1024 * 1024
    gx_bytes = T * Bg * 4 * H * 4
    in_block_bytes = 4 * (T * Bg * D + 2 * Bg * H + D * 4 * H + H * 4 * H + 4 * H
                          + H * FC1 + 2 * FC1 + 1)
    assert gx_bytes + 2 * in_block_bytes + (1 << 20) < vmem_limit, \
        "per-program VMEM footprint too large; chunk the recurrence over T"

    flops = (2 * T * B * D * 4 * H            # input projection (FMAs)
             + 2 * T * B * H * 4 * H          # recurrence h @ W_hh
             + 10 * T * B * H                 # gate / cell elementwise
             + 2 * B * H * FC1 + 4 * B * FC1)  # epilogue
    transcendentals = T * B * (2 * 4 * H + H) + B * FC1 + B
    bytes_accessed = 4 * (x_btd.size + 2 * B * H + wih.size + whh.size + b.size
                          + w1.size + b1.size + w2.size + b2.size + B)

    grid_spec = pltpu.PrefetchScalarGridSpec(
        num_scalar_prefetch=0,
        grid=(num_groups,),                          # parallel over batch groups
        in_specs=[
            pl.BlockSpec((T, Bg, D), lambda g: (0, g, 0)),       # x (time-major)
            pl.BlockSpec((Bg, H), lambda g: (g, 0)),             # h0
            pl.BlockSpec((Bg, H), lambda g: (g, 0)),             # c0
            pl.BlockSpec((D, 4 * H), lambda g: (0, 0)),          # W_ih^T
            pl.BlockSpec((H, 4 * H), lambda g: (0, 0)),          # W_hh^T
            pl.BlockSpec((1, 4 * H), lambda g: (0, 0)),          # b_ih + b_hh
            pl.BlockSpec((H, FC1), lambda g: (0, 0)),            # fc1 W^T
            pl.BlockSpec((1, FC1), lambda g: (0, 0)),            # fc1 b
            pl.BlockSpec((1, FC1), lambda g: (0, 0)),            # fc2 W (row vector)
            pl.BlockSpec((1, 1), lambda g: (0, 0)),              # fc2 b
        ],
        out_specs=pl.BlockSpec((Bg, 1), lambda g: (g, 0)),
    )

    out = pl.pallas_call(
        partial(duration_kernel, seq_len=T, unroll_limit=unroll_limit,
                matmul_dtype=matmul_dtype),
        out_shape=jax.ShapeDtypeStruct((B, 1), jnp.float32),
        grid_spec=grid_spec,
        compiler_params=pltpu.CompilerParams(
            dimension_semantics=("parallel",),
            vmem_limit_bytes=vmem_limit),
        cost_estimate=pl.CostEstimate(flops=int(flops),
                                      transcendentals=int(transcendentals),
                                      bytes_accessed=int(bytes_accessed)),
    )(x_tbd, h0_2d, c0_2d, wih, whh, b, w1, b1, w2, b2)

    return out.reshape(1, B, 1)


def duration_net_ref(x_btd, h0, c0, params):
    """Pure-JAX f32 reference (HIGHEST matmul precision) for correctness checks."""
    B, T, D = x_btd.shape
    H = h0.shape[-1]
    hp = jax.lax.Precision.HIGHEST
    h, c = h0[0], c0[0]
    for t in range(T):
        gates = (jnp.dot(x_btd[:, t, :], params["wih"], precision=hp)
                 + jnp.dot(h, params["whh"], precision=hp) + params["b"])
        i_g = jax.nn.sigmoid(gates[:, 0 * H:1 * H])
        f_g = jax.nn.sigmoid(gates[:, 1 * H:2 * H])
        g_g = jnp.tanh(gates[:, 2 * H:3 * H])
        o_g = jax.nn.sigmoid(gates[:, 3 * H:4 * H])
        c = f_g * c + i_g * g_g
        h = o_g * jnp.tanh(c)
    z1 = jnp.maximum(jnp.dot(h, params["w1"], precision=hp) + params["b1"], 0.0)
    z2 = jnp.sum(z1 * params["w2"], axis=-1, keepdims=True) + params["b2"]
    return jnp.tanh(z2)[None]                        # (1, B, 1)


def make_params(key, input_dim, hidden_dim, fc1_dim=24):
    """Deterministic synthetic parameters matching nn.LSTM / nn.Linear shapes."""
    ks = jax.random.split(key, 8)
    H = hidden_dim
    scale = 1.0 / jnp.sqrt(jnp.float32(H))
    # torch stores weight_ih as (4H, D); we keep the transpose (D, 4H).
    wih = jax.random.uniform(ks[0], (input_dim, 4 * H), jnp.float32, -scale, scale)
    whh = jax.random.uniform(ks[1], (H, 4 * H), jnp.float32, -scale, scale)
    b_ih = jax.random.uniform(ks[2], (1, 4 * H), jnp.float32, -scale, scale)
    b_hh = jax.random.uniform(ks[3], (1, 4 * H), jnp.float32, -scale, scale)
    w1 = jax.random.uniform(ks[4], (H, fc1_dim), jnp.float32, -scale, scale)
    b1 = jax.random.uniform(ks[5], (1, fc1_dim), jnp.float32, -scale, scale)
    # fc2.weight in torch is (1, 24); keep that row-vector layout directly.
    w2 = jax.random.uniform(ks[6], (1, fc1_dim), jnp.float32, -scale, scale)
    b2 = jax.random.uniform(ks[7], (1, 1), jnp.float32, -scale, scale)
    return {"wih": wih, "whh": whh, "b": b_ih + b_hh,
            "w1": w1, "b1": b1, "w2": w2, "b2": b2}


if __name__ == "__main__":
    # Small shapes: 16 sequences (2 parallel groups of 8), seq=8, input_dim=3, hidden=32.
    B, T, D, H = 16, 8, 3, 32
    NUM_GROUPS = 2     # v7x: one batch group per TensorCore; harmless on v5e/v6e.

    key = jax.random.PRNGKey(0)
    kx, kp = jax.random.split(key)
    x = jax.random.normal(kx, (B, T, D), jnp.float32)         # batch_first like torch
    params = make_params(kp, D, H)

    # init_hidden(batch_size): zeros of shape (n_layers, B, H)
    h0 = jnp.zeros((1, B, H), jnp.float32)
    c0 = jnp.zeros((1, B, H), jnp.float32)

    ref = duration_net_ref(x, h0, c0, params)                 # (1, B, 1)

    # f32 MXU operands: tight check against the f32 reference.
    out_f32 = duration_net_forward(x, h0, c0, params, num_groups=NUM_GROUPS,
                                   matmul_dtype=jnp.float32)
    jax.block_until_ready(out_f32)
    assert out_f32.shape == (1, B, 1)
    assert jnp.allclose(out_f32, ref, atol=5e-3, rtol=5e-3), "f32 kernel mismatch vs ref"

    # bf16 MXU operands with f32 accumulation: the performance configuration.
    out_bf16 = duration_net_forward(x, h0, c0, params, num_groups=NUM_GROUPS,
                                    matmul_dtype=jnp.bfloat16)
    jax.block_until_ready(out_bf16)
    assert out_bf16.shape == (1, B, 1)
    assert jnp.allclose(out_bf16, ref, atol=5e-2, rtol=5e-2), "bf16 kernel mismatch vs ref"

    print("KERNEL_OK")
</pallas_src>

<mosaic_0001>
module attributes {stable_mosaic.version = 11 : i64} {
  func.func @duration_kernel(%arg0: i32, %arg1: memref<8x8x3xf32, #tpu.memory_space<vmem>>, %arg2: memref<8x32xf32, #tpu.memory_space<vmem>>, %arg3: memref<8x32xf32, #tpu.memory_space<vmem>>, %arg4: memref<3x128xf32, #tpu.memory_space<vmem>>, %arg5: memref<32x128xf32, #tpu.memory_space<vmem>>, %arg6: memref<1x128xf32, #tpu.memory_space<vmem>>, %arg7: memref<32x24xf32, #tpu.memory_space<vmem>>, %arg8: memref<1x24xf32, #tpu.memory_space<vmem>>, %arg9: memref<1x24xf32, #tpu.memory_space<vmem>>, %arg10: memref<1x1xf32, #tpu.memory_space<vmem>>, %arg11: memref<8x1xf32, #tpu.memory_space<vmem>>) attributes {dimension_semantics = [#tpu.dimension_semantics<parallel>], iteration_bounds = array<i64: 2>, scalar_prefetch = 0 : i64, scratch_operands = 0 : i64, tpu.core_type = #tpu.core_type<tc>, window_params = [{transform_indices = @transform_0, window_bounds = array<i64: 8, 8, 3>}, {transform_indices = @transform_1, window_bounds = array<i64: 8, 32>}, {transform_indices = @transform_2, window_bounds = array<i64: 8, 32>}, {pipeline_mode = #tpu.pipeline_mode<synchronous>, transform_indices = @transform_3, window_bounds = array<i64: 3, 128>}, {pipeline_mode = #tpu.pipeline_mode<synchronous>, transform_indices = @transform_4, window_bounds = array<i64: 32, 128>}, {pipeline_mode = #tpu.pipeline_mode<synchronous>, transform_indices = @transform_5, window_bounds = array<i64: 1, 128>}, {pipeline_mode = #tpu.pipeline_mode<synchronous>, transform_indices = @transform_6, window_bounds = array<i64: 32, 24>}, {pipeline_mode = #tpu.pipeline_mode<synchronous>, transform_indices = @transform_7, window_bounds = array<i64: 1, 24>}, {pipeline_mode = #tpu.pipeline_mode<synchronous>, transform_indices = @transform_8, window_bounds = array<i64: 1, 24>}, {pipeline_mode = #tpu.pipeline_mode<synchronous>, transform_indices = @transform_9, window_bounds = array<i64: 1, 1>}, {transform_indices = @transform_10, window_bounds = array<i64: 8, 1>}]} {
    %c0 = arith.constant 0 : index
    %c0_0 = arith.constant 0 : index
    %c0_1 = arith.constant 0 : index
    %0 = vector.load %arg1[%c0, %c0_0, %c0_1] : memref<8x8x3xf32, #tpu.memory_space<vmem>>, vector<8x8x3xf32>
    %c0_2 = arith.constant 0 : index
    %c0_3 = arith.constant 0 : index
    %1 = vector.load %arg4[%c0_2, %c0_3] : memref<3x128xf32, #tpu.memory_space<vmem>>, vector<3x128xf32>
    %c0_4 = arith.constant 0 : index
    %c0_5 = arith.constant 0 : index
    %2 = vector.load %arg6[%c0_4, %c0_5] : memref<1x128xf32, #tpu.memory_space<vmem>>, vector<1x128xf32>
    %3 = vector.shape_cast %2 : vector<1x128xf32> to vector<1x1x128xf32>
    %4 = vector.extract_strided_slice %0 {offsets = [0, 0, 0], sizes = [8, 8, 1], strides = [1, 1, 1]} : vector<8x8x3xf32> to vector<8x8x1xf32>
    %5 = vector.extract_strided_slice %1 {offsets = [0, 0], sizes = [1, 128], strides = [1, 1]} : vector<3x128xf32> to vector<1x128xf32>
    %6 = vector.shape_cast %5 : vector<1x128xf32> to vector<1x1x128xf32>
    %7 = vector.broadcast %4 : vector<8x8x1xf32> to vector<8x8x128xf32>
    %8 = vector.broadcast %6 : vector<1x1x128xf32> to vector<8x8x128xf32>
    %9 = arith.mulf %7, %8 : vector<8x8x128xf32>
    %10 = vector.broadcast %3 : vector<1x1x128xf32> to vector<8x8x128xf32>
    %11 = arith.addf %10, %9 : vector<8x8x128xf32>
    %12 = vector.extract_strided_slice %0 {offsets = [0, 0, 1], sizes = [8, 8, 1], strides = [1, 1, 1]} : vector<8x8x3xf32> to vector<8x8x1xf32>
    %13 = vector.extract_strided_slice %1 {offsets = [1, 0], sizes = [1, 128], strides = [1, 1]} : vector<3x128xf32> to vector<1x128xf32>
    %14 = vector.shape_cast %13 : vector<1x128xf32> to vector<1x1x128xf32>
    %15 = vector.broadcast %12 : vector<8x8x1xf32> to vector<8x8x128xf32>
    %16 = vector.broadcast %14 : vector<1x1x128xf32> to vector<8x8x128xf32>
    %17 = arith.mulf %15, %16 : vector<8x8x128xf32>
    %18 = arith.addf %11, %17 : vector<8x8x128xf32>
    %19 = vector.extract_strided_slice %0 {offsets = [0, 0, 2], sizes = [8, 8, 1], strides = [1, 1, 1]} : vector<8x8x3xf32> to vector<8x8x1xf32>
    %20 = vector.extract_strided_slice %1 {offsets = [2, 0], sizes = [1, 128], strides = [1, 1]} : vector<3x128xf32> to vector<1x128xf32>
    %21 = vector.shape_cast %20 : vector<1x128xf32> to vector<1x1x128xf32>
    %22 = vector.broadcast %19 : vector<8x8x1xf32> to vector<8x8x128xf32>
    %23 = vector.broadcast %21 : vector<1x1x128xf32> to vector<8x8x128xf32>
    %24 = arith.mulf %22, %23 : vector<8x8x128xf32>
    %25 = arith.addf %18, %24 : vector<8x8x128xf32>
    %c0_6 = arith.constant 0 : index
    %c0_7 = arith.constant 0 : index
    %26 = vector.load %arg5[%c0_6, %c0_7] : memref<32x128xf32, #tpu.memory_space<vmem>>, vector<32x128xf32>
    %c0_8 = arith.constant 0 : index
    %c0_9 = arith.constant 0 : index
    %27 = vector.load %arg2[%c0_8, %c0_9] : memref<8x32xf32, #tpu.memory_space<vmem>>, vector<8x32xf32>
    %c0_10 = arith.constant 0 : index
    %c0_11 = arith.constant 0 : index
    %28 = vector.load %arg3[%c0_10, %c0_11] : memref<8x32xf32, #tpu.memory_space<vmem>>, vector<8x32xf32>
    %29 = vector.extract_strided_slice %25 {offsets = [0, 0, 0], sizes = [1, 8, 128], strides = [1, 1, 1]} : vector<8x8x128xf32> to vector<1x8x128xf32>
    %30 = vector.shape_cast %29 : vector<1x8x128xf32> to vector<8x128xf32>
    %cst = arith.constant dense<0.000000e+00> : vector<8x128xf32>
    %31 = tpu.matmul %27, %26, %cst {dimension_numbers = #tpu.dot_dimension_numbers<[1], [0], [0], [1], [0, 0, 1, 1], [], []>} : vector<8x32xf32>, vector<32x128xf32>, vector<8x128xf32> -> vector<8x128xf32>
    %32 = arith.addf %30, %31 : vector<8x128xf32>
    %33 = arith.negf %32 : vector<8x128xf32>
    %34 = math.exp %33 : vector<8x128xf32>
    %cst_12 = arith.constant 1.000000e+00 : f32
    %35 = vector.broadcast %cst_12 : f32 to vector<8x128xf32>
    %36 = arith.addf %35, %34 : vector<8x128xf32>
    %37 = arith.divf %35, %36 : vector<8x128xf32>
    %38 = math.tanh %32 : vector<8x128xf32>
    %39 = vector.extract_strided_slice %37 {offsets = [0, 0], sizes = [8, 32], strides = [1, 1]} : vector<8x128xf32> to vector<8x32xf32>
    %40 = vector.extract_strided_slice %37 {offsets = [0, 32], sizes = [8, 32], strides = [1, 1]} : vector<8x128xf32> to vector<8x32xf32>
    %41 = vector.extract_strided_slice %38 {offsets = [0, 64], sizes = [8, 32], strides = [1, 1]} : vector<8x128xf32> to vector<8x32xf32>
    %42 = vector.extract_strided_slice %37 {offsets = [0, 96], sizes = [8, 32], strides = [1, 1]} : vector<8x128xf32> to vector<8x32xf32>
    %43 = arith.mulf %40, %28 : vector<8x32xf32>
    %44 = arith.mulf %39, %41 : vector<8x32xf32>
    %45 = arith.addf %43, %44 : vector<8x32xf32>
    %46 = math.tanh %45 : vector<8x32xf32>
    %47 = arith.mulf %42, %46 : vector<8x32xf32>
    %48 = vector.extract_strided_slice %25 {offsets = [1, 0, 0], sizes = [1, 8, 128], strides = [1, 1, 1]} : vector<8x8x128xf32> to vector<1x8x128xf32>
    %49 = vector.shape_cast %48 : vector<1x8x128xf32> to vector<8x128xf32>
    %cst_13 = arith.constant dense<0.000000e+00> : vector<8x128xf32>
    %50 = tpu.matmul %47, %26, %cst_13 {dimension_numbers = #tpu.dot_dimension_numbers<[1], [0], [0], [1], [0, 0, 1, 1], [], []>} : vector<8x32xf32>, vector<32x128xf32>, vector<8x128xf32> -> vector<8x128xf32>
    %51 = arith.addf %49, %50 : vector<8x128xf32>
    %52 = arith.negf %51 : vector<8x128xf32>
    %53 = math.exp %52 : vector<8x128xf32>
    %cst_14 = arith.constant 1.000000e+00 : f32
    %54 = vector.broadcast %cst_14 : f32 to vector<8x128xf32>
    %55 = arith.addf %54, %53 : vector<8x128xf32>
    %56 = arith.divf %54, %55 : vector<8x128xf32>
    %57 = math.tanh %51 : vector<8x128xf32>
    %58 = vector.extract_strided_slice %56 {offsets = [0, 0], sizes = [8, 32], strides = [1, 1]} : vector<8x128xf32> to vector<8x32xf32>
    %59 = vector.extract_strided_slice %56 {offsets = [0, 32], sizes = [8, 32], strides = [1, 1]} : vector<8x128xf32> to vector<8x32xf32>
    %60 = vector.extract_strided_slice %57 {offsets = [0, 64], sizes = [8, 32], strides = [1, 1]} : vector<8x128xf32> to vector<8x32xf32>
    %61 = vector.extract_strided_slice %56 {offsets = [0, 96], sizes = [8, 32], strides = [1, 1]} : vector<8x128xf32> to vector<8x32xf32>
    %62 = arith.mulf %59, %45 : vector<8x32xf32>
    %63 = arith.mulf %58, %60 : vector<8x32xf32>
    %64 = arith.addf %62, %63 : vector<8x32xf32>
    %65 = math.tanh %64 : vector<8x32xf32>
    %66 = arith.mulf %61, %65 : vector<8x32xf32>
    %67 = vector.extract_strided_slice %25 {offsets = [2, 0, 0], sizes = [1, 8, 128], strides = [1, 1, 1]} : vector<8x8x128xf32> to vector<1x8x128xf32>
    %68 = vector.shape_cast %67 : vector<1x8x128xf32> to vector<8x128xf32>
    %cst_15 = arith.constant dense<0.000000e+00> : vector<8x128xf32>
    %69 = tpu.matmul %66, %26, %cst_15 {dimension_numbers = #tpu.dot_dimension_numbers<[1], [0], [0], [1], [0, 0, 1, 1], [], []>} : vector<8x32xf32>, vector<32x128xf32>, vector<8x128xf32> -> vector<8x128xf32>
    %70 = arith.addf %68, %69 : vector<8x128xf32>
    %71 = arith.negf %70 : vector<8x128xf32>
    %72 = math.exp %71 : vector<8x128xf32>
    %cst_16 = arith.constant 1.000000e+00 : f32
    %73 = vector.broadcast %cst_16 : f32 to vector<8x128xf32>
    %74 = arith.addf %73, %72 : vector<8x128xf32>
    %75 = arith.divf %73, %74 : vector<8x128xf32>
    %76 = math.tanh %70 : vector<8x128xf32>
    %77 = vector.extract_strided_slice %75 {offsets = [0, 0], sizes = [8, 32], strides = [1, 1]} : vector<8x128xf32> to vector<8x32xf32>
    %78 = vector.extract_strided_slice %75 {offsets = [0, 32], sizes = [8, 32], strides = [1, 1]} : vector<8x128xf32> to vector<8x32xf32>
    %79 = vector.extract_strided_slice %76 {offsets = [0, 64], sizes = [8, 32], strides = [1, 1]} : vector<8x128xf32> to vector<8x32xf32>
    %80 = vector.extract_strided_slice %75 {offsets = [0, 96], sizes = [8, 32], strides = [1, 1]} : vector<8x128xf32> to vector<8x32xf32>
    %81 = arith.mulf %78, %64 : vector<8x32xf32>
    %82 = arith.mulf %77, %79 : vector<8x32xf32>
    %83 = arith.addf %81, %82 : vector<8x32xf32>
    %84 = math.tanh %83 : vector<8x32xf32>
    %85 = arith.mulf %80, %84 : vector<8x32xf32>
    %86 = vector.extract_strided_slice %25 {offsets = [3, 0, 0], sizes = [1, 8, 128], strides = [1, 1, 1]} : vector<8x8x128xf32> to vector<1x8x128xf32>
    %87 = vector.shape_cast %86 : vector<1x8x128xf32> to vector<8x128xf32>
    %cst_17 = arith.constant dense<0.000000e+00> : vector<8x128xf32>
    %88 = tpu.matmul %85, %26, %cst_17 {dimension_numbers = #tpu.dot_dimension_numbers<[1], [0], [0], [1], [0, 0, 1, 1], [], []>} : vector<8x32xf32>, vector<32x128xf32>, vector<8x128xf32> -> vector<8x128xf32>
    %89 = arith.addf %87, %88 : vector<8x128xf32>
    %90 = arith.negf %89 : vector<8x128xf32>
    %91 = math.exp %90 : vector<8x128xf32>
    %cst_18 = arith.constant 1.000000e+00 : f32
    %92 = vector.broadcast %cst_18 : f32 to vector<8x128xf32>
    %93 = arith.addf %92, %91 : vector<8x128xf32>
    %94 = arith.divf %92, %93 : vector<8x128xf32>
    %95 = math.tanh %89 : vector<8x128xf32>
    %96 = vector.extract_strided_slice %94 {offsets = [0, 0], sizes = [8, 32], strides = [1, 1]} : vector<8x128xf32> to vector<8x32xf32>
    %97 = vector.extract_strided_slice %94 {offsets = [0, 32], sizes = [8, 32], strides = [1, 1]} : vector<8x128xf32> to vector<8x32xf32>
    %98 = vector.extract_strided_slice %95 {offsets = [0, 64], sizes = [8, 32], strides = [1, 1]} : vector<8x128xf32> to vector<8x32xf32>
    %99 = vector.extract_strided_slice %94 {offsets = [0, 96], sizes = [8, 32], strides = [1, 1]} : vector<8x128xf32> to vector<8x32xf32>
    %100 = arith.mulf %97, %83 : vector<8x32xf32>
    %101 = arith.mulf %96, %98 : vector<8x32xf32>
    %102 = arith.addf %100, %101 : vector<8x32xf32>
    %103 = math.tanh %102 : vector<8x32xf32>
    %104 = arith.mulf %99, %103 : vector<8x32xf32>
    %105 = vector.extract_strided_slice %25 {offsets = [4, 0, 0], sizes = [1, 8, 128], strides = [1, 1, 1]} : vector<8x8x128xf32> to vector<1x8x128xf32>
    %106 = vector.shape_cast %105 : vector<1x8x128xf32> to vector<8x128xf32>
    %cst_19 = arith.constant dense<0.000000e+00> : vector<8x128xf32>
    %107 = tpu.matmul %104, %26, %cst_19 {dimension_numbers = #tpu.dot_dimension_numbers<[1], [0], [0], [1], [0, 0, 1, 1], [], []>} : vector<8x32xf32>, vector<32x128xf32>, vector<8x128xf32> -> vector<8x128xf32>
    %108 = arith.addf %106, %107 : vector<8x128xf32>
    %109 = arith.negf %108 : vector<8x128xf32>
    %110 = math.exp %109 : vector<8x128xf32>
    %cst_20 = arith.constant 1.000000e+00 : f32
    %111 = vector.broadcast %cst_20 : f32 to vector<8x128xf32>
    %112 = arith.addf %111, %110 : vector<8x128xf32>
    %113 = arith.divf %111, %112 : vector<8x128xf32>
    %114 = math.tanh %108 : vector<8x128xf32>
    %115 = vector.extract_strided_slice %113 {offsets = [0, 0], sizes = [8, 32], strides = [1, 1]} : vector<8x128xf32> to vector<8x32xf32>
    %116 = vector.extract_strided_slice %113 {offsets = [0, 32], sizes = [8, 32], strides = [1, 1]} : vector<8x128xf32> to vector<8x32xf32>
    %117 = vector.extract_strided_slice %114 {offsets = [0, 64], sizes = [8, 32], strides = [1, 1]} : vector<8x128xf32> to vector<8x32xf32>
    %118 = vector.extract_strided_slice %113 {offsets = [0, 96], sizes = [8, 32], strides = [1, 1]} : vector<8x128xf32> to vector<8x32xf32>
    %119 = arith.mulf %116, %102 : vector<8x32xf32>
    %120 = arith.mulf %115, %117 : vector<8x32xf32>
    %121 = arith.addf %119, %120 : vector<8x32xf32>
    %122 = math.tanh %121 : vector<8x32xf32>
    %123 = arith.mulf %118, %122 : vector<8x32xf32>
    %124 = vector.extract_strided_slice %25 {offsets = [5, 0, 0], sizes = [1, 8, 128], strides = [1, 1, 1]} : vector<8x8x128xf32> to vector<1x8x128xf32>
    %125 = vector.shape_cast %124 : vector<1x8x128xf32> to vector<8x128xf32>
    %cst_21 = arith.constant dense<0.000000e+00> : vector<8x128xf32>
    %126 = tpu.matmul %123, %26, %cst_21 {dimension_numbers = #tpu.dot_dimension_numbers<[1], [0], [0], [1], [0, 0, 1, 1], [], []>} : vector<8x32xf32>, vector<32x128xf32>, vector<8x128xf32> -> vector<8x128xf32>
    %127 = arith.addf %125, %126 : vector<8x128xf32>
    %128 = arith.negf %127 : vector<8x128xf32>
    %129 = math.exp %128 : vector<8x128xf32>
    %cst_22 = arith.constant 1.000000e+00 : f32
    %130 = vector.broadcast %cst_22 : f32 to vector<8x128xf32>
    %131 = arith.addf %130, %129 : vector<8x128xf32>
    %132 = arith.divf %130, %131 : vector<8x128xf32>
    %133 = math.tanh %127 : vector<8x128xf32>
    %134 = vector.extract_strided_slice %132 {offsets = [0, 0], sizes = [8, 32], strides = [1, 1]} : vector<8x128xf32> to vector<8x32xf32>
    %135 = vector.extract_strided_slice %132 {offsets = [0, 32], sizes = [8, 32], strides = [1, 1]} : vector<8x128xf32> to vector<8x32xf32>
    %136 = vector.extract_strided_slice %133 {offsets = [0, 64], sizes = [8, 32], strides = [1, 1]} : vector<8x128xf32> to vector<8x32xf32>
    %137 = vector.extract_strided_slice %132 {offsets = [0, 96], sizes = [8, 32], strides = [1, 1]} : vector<8x128xf32> to vector<8x32xf32>
    %138 = arith.mulf %135, %121 : vector<8x32xf32>
    %139 = arith.mulf %134, %136 : vector<8x32xf32>
    %140 = arith.addf %138, %139 : vector<8x32xf32>
    %141 = math.tanh %140 : vector<8x32xf32>
    %142 = arith.mulf %137, %141 : vector<8x32xf32>
    %143 = vector.extract_strided_slice %25 {offsets = [6, 0, 0], sizes = [1, 8, 128], strides = [1, 1, 1]} : vector<8x8x128xf32> to vector<1x8x128xf32>
    %144 = vector.shape_cast %143 : vector<1x8x128xf32> to vector<8x128xf32>
    %cst_23 = arith.constant dense<0.000000e+00> : vector<8x128xf32>
    %145 = tpu.matmul %142, %26, %cst_23 {dimension_numbers = #tpu.dot_dimension_numbers<[1], [0], [0], [1], [0, 0, 1, 1], [], []>} : vector<8x32xf32>, vector<32x128xf32>, vector<8x128xf32> -> vector<8x128xf32>
    %146 = arith.addf %144, %145 : vector<8x128xf32>
    %147 = arith.negf %146 : vector<8x128xf32>
    %148 = math.exp %147 : vector<8x128xf32>
    %cst_24 = arith.constant 1.000000e+00 : f32
    %149 = vector.broadcast %cst_24 : f32 to vector<8x128xf32>
    %150 = arith.addf %149, %148 : vector<8x128xf32>
    %151 = arith.divf %149, %150 : vector<8x128xf32>
    %152 = math.tanh %146 : vector<8x128xf32>
    %153 = vector.extract_strided_slice %151 {offsets = [0, 0], sizes = [8, 32], strides = [1, 1]} : vector<8x128xf32> to vector<8x32xf32>
    %154 = vector.extract_strided_slice %151 {offsets = [0, 32], sizes = [8, 32], strides = [1, 1]} : vector<8x128xf32> to vector<8x32xf32>
    %155 = vector.extract_strided_slice %152 {offsets = [0, 64], sizes = [8, 32], strides = [1, 1]} : vector<8x128xf32> to vector<8x32xf32>
    %156 = vector.extract_strided_slice %151 {offsets = [0, 96], sizes = [8, 32], strides = [1, 1]} : vector<8x128xf32> to vector<8x32xf32>
    %157 = arith.mulf %154, %140 : vector<8x32xf32>
    %158 = arith.mulf %153, %155 : vector<8x32xf32>
    %159 = arith.addf %157, %158 : vector<8x32xf32>
    %160 = math.tanh %159 : vector<8x32xf32>
    %161 = arith.mulf %156, %160 : vector<8x32xf32>
    %162 = vector.extract_strided_slice %25 {offsets = [7, 0, 0], sizes = [1, 8, 128], strides = [1, 1, 1]} : vector<8x8x128xf32> to vector<1x8x128xf32>
    %163 = vector.shape_cast %162 : vector<1x8x128xf32> to vector<8x128xf32>
    %cst_25 = arith.constant dense<0.000000e+00> : vector<8x128xf32>
    %164 = tpu.matmul %161, %26, %cst_25 {dimension_numbers = #tpu.dot_dimension_numbers<[1], [0], [0], [1], [0, 0, 1, 1], [], []>} : vector<8x32xf32>, vector<32x128xf32>, vector<8x128xf32> -> vector<8x128xf32>
    %165 = arith.addf %163, %164 : vector<8x128xf32>
    %166 = arith.negf %165 : vector<8x128xf32>
    %167 = math.exp %166 : vector<8x128xf32>
    %cst_26 = arith.constant 1.000000e+00 : f32
    %168 = vector.broadcast %cst_26 : f32 to vector<8x128xf32>
    %169 = arith.addf %168, %167 : vector<8x128xf32>
    %170 = arith.divf %168, %169 : vector<8x128xf32>
    %171 = math.tanh %165 : vector<8x128xf32>
    %172 = vector.extract_strided_slice %170 {offsets = [0, 0], sizes = [8, 32], strides = [1, 1]} : vector<8x128xf32> to vector<8x32xf32>
    %173 = vector.extract_strided_slice %170 {offsets = [0, 32], sizes = [8, 32], strides = [1, 1]} : vector<8x128xf32> to vector<8x32xf32>
    %174 = vector.extract_strided_slice %171 {offsets = [0, 64], sizes = [8, 32], strides = [1, 1]} : vector<8x128xf32> to vector<8x32xf32>
    %175 = vector.extract_strided_slice %170 {offsets = [0, 96], sizes = [8, 32], strides = [1, 1]} : vector<8x128xf32> to vector<8x32xf32>
    %176 = arith.mulf %173, %159 : vector<8x32xf32>
    %177 = arith.mulf %172, %174 : vector<8x32xf32>
    %178 = arith.addf %176, %177 : vector<8x32xf32>
    %179 = math.tanh %178 : vector<8x32xf32>
    %180 = arith.mulf %175, %179 : vector<8x32xf32>
    %c0_27 = arith.constant 0 : index
    %c0_28 = arith.constant 0 : index
    %181 = vector.load %arg7[%c0_27, %c0_28] : memref<32x24xf32, #tpu.memory_space<vmem>>, vector<32x24xf32>
    %cst_29 = arith.constant dense<0.000000e+00> : vector<8x24xf32>
    %182 = tpu.matmul %180, %181, %cst_29 {dimension_numbers = #tpu.dot_dimension_numbers<[1], [0], [0], [1], [0, 0, 1, 1], [], []>} : vector<8x32xf32>, vector<32x24xf32>, vector<8x24xf32> -> vector<8x24xf32>
    %c0_30 = arith.constant 0 : index
    %c0_31 = arith.constant 0 : index
    %183 = vector.load %arg8[%c0_30, %c0_31] : memref<1x24xf32, #tpu.memory_space<vmem>>, vector<1x24xf32>
    %184 = vector.broadcast %183 : vector<1x24xf32> to vector<8x24xf32>
    %185 = arith.addf %182, %184 : vector<8x24xf32>
    %cst_32 = arith.constant 0.000000e+00 : f32
    %186 = vector.broadcast %cst_32 : f32 to vector<8x24xf32>
    %187 = arith.maximumf %185, %186 : vector<8x24xf32>
    %c0_33 = arith.constant 0 : index
    %c0_34 = arith.constant 0 : index
    %188 = vector.load %arg9[%c0_33, %c0_34] : memref<1x24xf32, #tpu.memory_space<vmem>>, vector<1x24xf32>
    %189 = vector.broadcast %188 : vector<1x24xf32> to vector<8x24xf32>
    %190 = arith.mulf %187, %189 : vector<8x24xf32>
    %cst_35 = arith.constant dense<0.000000e+00> : vector<8xf32>
    %191 = vector.multi_reduction <add>, %190, %cst_35 [1] : vector<8x24xf32> to vector<8xf32>
    %192 = vector.shape_cast %191 : vector<8xf32> to vector<8x1xf32>
    %c0_36 = arith.constant 0 : index
    %c0_37 = arith.constant 0 : index
    %193 = vector.load %arg10[%c0_36, %c0_37] : memref<1x1xf32, #tpu.memory_space<vmem>>, vector<1x1xf32>
    %194 = vector.broadcast %193 : vector<1x1xf32> to vector<8x1xf32>
    %195 = arith.addf %192, %194 : vector<8x1xf32>
    %196 = math.tanh %195 : vector<8x1xf32>
    %c0_38 = arith.constant 0 : index
    %c0_39 = arith.constant 0 : index
    %197 = vector.load %arg11[%c0_38, %c0_39] : memref<8x1xf32, #tpu.memory_space<vmem>>, vector<8x1xf32>
    tpu.vector_store %arg11[%c0_38, %c0_39], %196 {strides = array<i32>} : memref<8x1xf32, #tpu.memory_space<vmem>>, vector<8x1xf32>,
    return
  }
  func.func @transform_0(%arg0: i32) -> (i32, i32, i32) {
    %c0_i32 = arith.constant 0 : i32
    %c0_i32_0 = arith.constant 0 : i32
    %c0_i32_1 = arith.constant 0 : i32
    return %c0_i32, %arg0, %c0_i32_0 : i32, i32, i32
  }
  func.func @transform_1(%arg0: i32) -> (i32, i32) {
    %c0_i32 = arith.constant 0 : i32
    %c0_i32_0 = arith.constant 0 : i32
    return %arg0, %c0_i32 : i32, i32
  }
  func.func @transform_2(%arg0: i32) -> (i32, i32) {
    %c0_i32 = arith.constant 0 : i32
    %c0_i32_0 = arith.constant 0 : i32
    return %arg0, %c0_i32 : i32, i32
  }
  func.func @transform_3(%arg0: i32) -> (i32, i32) {
    %c0_i32 = arith.constant 0 : i32
    %c0_i32_0 = arith.constant 0 : i32
    %c0_i32_1 = arith.constant 0 : i32
    return %c0_i32, %c0_i32_0 : i32, i32
  }
  func.func @transform_4(%arg0: i32) -> (i32, i32) {
    %c0_i32 = arith.constant 0 : i32
    %c0_i32_0 = arith.constant 0 : i32
    %c0_i32_1 = arith.constant 0 : i32
    return %c0_i32, %c0_i32_0 : i32, i32
  }
  func.func @transform_5(%arg0: i32) -> (i32, i32) {
    %c0_i32 = arith.constant 0 : i32
    %c0_i32_0 = arith.constant 0 : i32
    %c0_i32_1 = arith.constant 0 : i32
    return %c0_i32, %c0_i32_0 : i32, i32
  }
  func.func @transform_6(%arg0: i32) -> (i32, i32) {
    %c0_i32 = arith.constant 0 : i32
    %c0_i32_0 = arith.constant 0 : i32
    %c0_i32_1 = arith.constant 0 : i32
    return %c0_i32, %c0_i32_0 : i32, i32
  }
  func.func @transform_7(%arg0: i32) -> (i32, i32) {
    %c0_i32 = arith.constant 0 : i32
    %c0_i32_0 = arith.constant 0 : i32
    %c0_i32_1 = arith.constant 0 : i32
    return %c0_i32, %c0_i32_0 : i32, i32
  }
  func.func @transform_8(%arg0: i32) -> (i32, i32) {
    %c0_i32 = arith.constant 0 : i32
    %c0_i32_0 = arith.constant 0 : i32
    %c0_i32_1 = arith.constant 0 : i32
    return %c0_i32, %c0_i32_0 : i32, i32
  }
  func.func @transform_9(%arg0: i32) -> (i32, i32) {
    %c0_i32 = arith.constant 0 : i32
    %c0_i32_0 = arith.constant 0 : i32
    %c0_i32_1 = arith.constant 0 : i32
    return %c0_i32, %c0_i32_0 : i32, i32
  }
  func.func @transform_10(%arg0: i32) -> (i32, i32) {
    %c0_i32 = arith.constant 0 : i32
    %c0_i32_0 = arith.constant 0 : i32
    return %arg0, %c0_i32 : i32, i32
  }
}

</mosaic_0001>

<llo_original>
// kernel: tpu_custom_call.1
$region0: #{tpu_custom_call.1}
  #allocation0 [shape = 'u32[]', space=smem, size = 0x4, offset = 0x4, fixed_abs, tag = 'smem constant byte address 0x4 - core index']
  #allocation1 [shape = 'u32[144,128]{1,0:T(1,128)}', space=vmem, size = 0x12000, scoped, tag = 'internal scratch']
  #allocation2 [shape = 'f32[1,1]{1,0:T(1,128)S(1)}', space=vmem, size = 0x200, scoped, tag = 'scoped memory for tpu_custom_call.1']
  %s0 = inlined_call_operand.vmem [shape: f32[8,16,3], index: 0, kind: input, shape index: {}]
  %s1 = inlined_call_operand.vmem [shape: f32[16,32], index: 1, kind: input, shape index: {}]
  %s2 = inlined_call_operand.vmem [shape: f32[16,32], index: 2, kind: input, shape index: {}]
  %s3 = inlined_call_operand.vmem [shape: f32[3,128], index: 3, kind: input, shape index: {}]
  %s4 = inlined_call_operand.vmem [shape: f32[32,128], index: 4, kind: input, shape index: {}]
  %s5 = inlined_call_operand.vmem [shape: f32[1,128], index: 5, kind: input, shape index: {}]
  %s6 = inlined_call_operand.vmem [shape: f32[32,24], index: 6, kind: input, shape index: {}]
  %s7 = inlined_call_operand.vmem [shape: f32[1,24], index: 7, kind: input, shape index: {}]
  %s8 = inlined_call_operand.vmem [shape: f32[1,24], index: 8, kind: input, shape index: {}]
  %s9 = inlined_call_operand.<no memory space> [shape: f32[1,1], index: 9, kind: input, shape index: {}]
  %s10 = inlined_call_operand.vmem [shape: f32[16,1], index: 10, kind: output, shape index: {}]
  %s11 = sld [smem:[#allocation0]]
  $region111: #{tpu_custom_call.1} parent=0
    _
  %s13 = ssub.s32 1, %s11
  %s14 = scalar_select 0, %s13, %s11
  %v15 = vstv %s9
  %16 = vst [vmem:[#allocation2] sm:$0x1] %v15
  $region1: #{tpu_custom_call.1} parent=0
    #allocation3 [shape = 'u8[65536]{0}', space=vmem, size = 0x10000, scoped, tag = 'input window, operand 0']
    loop: start=0, step=1, limit=4
    $region2: #{tpu_custom_call.1} parent=1 // loop_pre_header
      _
    $region3: #{tpu_custom_call.1} parent=1 // loop_header
      %s18 = sphi 0, %s22
      %p19 = scmp.ge.s32.totalorder %s18, 4
      %s28 = sphi 0, %s30
      %s31 = sphi 0, %s28
      %s32 = sphi 0, %s31
      %s48 = sphi 0, %s32
      %s54 = sphi 0, %s56
      %s57 = sphi 0, %s54
      %s58 = sphi 0, %s57
      %s74 = sphi 0, %s58
      %s80 = sphi 0, %s82
      %s83 = sphi 0, %s80
      %s84 = sphi 0, %s83
      %s100 = sphi 0, %s84
      %s104 = sphi 0, %s104
      %s106 = sphi 0, %s104
      %s107 = sphi 0, %s106
      %s121 = sphi 0, %s107
      %s125 = sphi 0, %s125
      %s127 = sphi 0, %s125
      %s128 = sphi 0, %s127
      %s142 = sphi 0, %s128
      %s146 = sphi 0, %s146
      %s148 = sphi 0, %s146
      %s149 = sphi 0, %s148
      %s163 = sphi 0, %s149
      %s167 = sphi 0, %s167
      %s169 = sphi 0, %s167
      %s170 = sphi 0, %s169
      %s184 = sphi 0, %s170
      %s188 = sphi 0, %s188
      %s190 = sphi 0, %s188
      %s191 = sphi 0, %s190
      %s205 = sphi 0, %s191
      %s209 = sphi 0, %s209
      %s211 = sphi 0, %s209
      %s212 = sphi 0, %s211
      %s226 = sphi 0, %s212
      %s230 = sphi 0, %s230
      %s232 = sphi 0, %s230
      %s233 = sphi 0, %s232
      %s247 = sphi 0, %s233
      %s253 = sphi 0, %s255
      %s256 = sphi 0, %s253
      %s257 = sphi 0, %s256
      %s273 = sphi 0, %s257
    $region4: #{tpu_custom_call.1} parent=1 // loop_header_branch
      %21 = sbr.rel (%p19) target = $region8
    $region5: #{tpu_custom_call.1} parent=1 // loop_body
      %s23 = ssub.s32 %s18, 1
      %s24 = ssub.s32 %s18, 2
      %s25 = sadd.s32 %s18, 1
      %s26 = ssub.s32 %s18, %s25
      %p27 = scmp.eq.s32.totalorder %s26, 0
      %s29 = sadd.s32 %s28, 1
      %s30 = scalar_select %p27, %s28, %s29
      %p33 = pneg %p27
      %p34 = scmp.eq.s32.totalorder %s18, 1
      %p35 = por %p33, %p34
      %p36 = scmp.ne.s32.totalorder %s28, %s31
      %p37 = scmp.eq.s32.totalorder %s18, 0
      %p38 = por %p36, %p37
      %p39 = scmp.ne.s32.totalorder %s28, %s31
      %p40 = scmp.eq.s32.totalorder %s23, 1
      %p41 = por %p39, %p40
      %p42 = scmp.ne.s32.totalorder %s31, %s32
      %p43 = scmp.eq.s32.totalorder %s23, 0
      %p44 = por %p42, %p43
      %p45 = scmp.ne.s32.totalorder %s31, %s32
      %p46 = scmp.eq.s32.totalorder %s24, 1
      %p47 = por %p45, %p46
      %p49 = scmp.ne.s32.totalorder %s32, %s48
      %p50 = scmp.eq.s32.totalorder %s24, 0
      %p51 = por %p49, %p50
      %s52 = ssub.s32 %s18, %s25
      %p53 = scmp.eq.s32.totalorder %s52, 0
      %s55 = sadd.s32 %s54, 1
      %s56 = scalar_select %p53, %s54, %s55
      %p59 = pneg %p53
      %p60 = scmp.eq.s32.totalorder %s18, 1
      %p61 = por %p59, %p60
      %p62 = scmp.ne.s32.totalorder %s54, %s57
      %p63 = scmp.eq.s32.totalorder %s18, 0
      %p64 = por %p62, %p63
      %p65 = scmp.ne.s32.totalorder %s54, %s57
      %p66 = scmp.eq.s32.totalorder %s23, 1
      %p67 = por %p65, %p66
      %p68 = scmp.ne.s32.totalorder %s57, %s58
      %p69 = scmp.eq.s32.totalorder %s23, 0
      %p70 = por %p68, %p69
      %p71 = scmp.ne.s32.totalorder %s57, %s58
      %p72 = scmp.eq.s32.totalorder %s24, 1
      %p73 = por %p71, %p72
      %p75 = scmp.ne.s32.totalorder %s58, %s74
      %p76 = scmp.eq.s32.totalorder %s24, 0
      %p77 = por %p75, %p76
      %s78 = ssub.s32 %s18, %s25
      %p79 = scmp.eq.s32.totalorder %s78, 0
      %s81 = sadd.s32 %s80, 1
      %s82 = scalar_select %p79, %s80, %s81
      %p85 = pneg %p79
      %p86 = scmp.eq.s32.totalorder %s18, 1
      %p87 = por %p85, %p86
      %p88 = scmp.ne.s32.totalorder %s80, %s83
      %p89 = scmp.eq.s32.totalorder %s18, 0
      %p90 = por %p88, %p89
      %p91 = scmp.ne.s32.totalorder %s80, %s83
      %p92 = scmp.eq.s32.totalorder %s23, 1
      %p93 = por %p91, %p92
      %p94 = scmp.ne.s32.totalorder %s83, %s84
      %p95 = scmp.eq.s32.totalorder %s23, 0
      %p96 = por %p94, %p95
      %p97 = scmp.ne.s32.totalorder %s83, %s84
      %p98 = scmp.eq.s32.totalorder %s24, 1
      %p99 = por %p97, %p98
      %p101 = scmp.ne.s32.totalorder %s84, %s100
      %p102 = scmp.eq.s32.totalorder %s24, 0
      %p103 = por %p101, %p102
      %s105 = sadd.s32 %s104, 1
      %p108 = scmp.eq.s32.totalorder %s18, 1
      %p109 = scmp.ne.s32.totalorder %s104, %s106
      %p110 = scmp.eq.s32.totalorder %s18, 0
      %p111 = por %p109, %p110
      %p112 = scmp.ne.s32.totalorder %s104, %s106
      %p113 = scmp.eq.s32.totalorder %s23, 1
      %p114 = por %p112, %p113
      %p115 = scmp.ne.s32.totalorder %s106, %s107
      %p116 = scmp.eq.s32.totalorder %s23, 0
      %p117 = por %p115, %p116
      %p118 = scmp.ne.s32.totalorder %s106, %s107
      %p119 = scmp.eq.s32.totalorder %s24, 1
      %p120 = por %p118, %p119
      %p122 = scmp.ne.s32.totalorder %s107, %s121
      %p123 = scmp.eq.s32.totalorder %s24, 0
      %p124 = por %p122, %p123
      %s126 = sadd.s32 %s125, 1
      %p129 = scmp.eq.s32.totalorder %s18, 1
      %p130 = scmp.ne.s32.totalorder %s125, %s127
      %p131 = scmp.eq.s32.totalorder %s18, 0
      %p132 = por %p130, %p131
      %p133 = scmp.ne.s32.totalorder %s125, %s127
      %p134 = scmp.eq.s32.totalorder %s23, 1
      %p135 = por %p133, %p134
      %p136 = scmp.ne.s32.totalorder %s127, %s128
      %p137 = scmp.eq.s32.totalorder %s23, 0
      %p138 = por %p136, %p137
      %p139 = scmp.ne.s32.totalorder %s127, %s128
      %p140 = scmp.eq.s32.totalorder %s24, 1
      %p141 = por %p139, %p140
      %p143 = scmp.ne.s32.totalorder %s128, %s142
      %p144 = scmp.eq.s32.totalorder %s24, 0
      %p145 = por %p143, %p144
      %s147 = sadd.s32 %s146, 1
      %p150 = scmp.eq.s32.totalorder %s18, 1
      %p151 = scmp.ne.s32.totalorder %s146, %s148
      %p152 = scmp.eq.s32.totalorder %s18, 0
      %p153 = por %p151, %p152
      %p154 = scmp.ne.s32.totalorder %s146, %s148
      %p155 = scmp.eq.s32.totalorder %s23, 1
      %p156 = por %p154, %p155
      %p157 = scmp.ne.s32.totalorder %s148, %s149
      %p158 = scmp.eq.s32.totalorder %s23, 0
      %p159 = por %p157, %p158
      %p160 = scmp.ne.s32.totalorder %s148, %s149
      %p161 = scmp.eq.s32.totalorder %s24, 1
      %p162 = por %p160, %p161
      %p164 = scmp.ne.s32.totalorder %s149, %s163
      %p165 = scmp.eq.s32.totalorder %s24, 0
      %p166 = por %p164, %p165
      %s168 = sadd.s32 %s167, 1
      %p171 = scmp.eq.s32.totalorder %s18, 1
      %p172 = scmp.ne.s32.totalorder %s167, %s169
      %p173 = scmp.eq.s32.totalorder %s18, 0
      %p174 = por %p172, %p173
      %p175 = scmp.ne.s32.totalorder %s167, %s169
      %p176 = scmp.eq.s32.totalorder %s23, 1
      %p177 = por %p175, %p176
      %p178 = scmp.ne.s32.totalorder %s169, %s170
      %p179 = scmp.eq.s32.totalorder %s23, 0
      %p180 = por %p178, %p179
      %p181 = scmp.ne.s32.totalorder %s169, %s170
      %p182 = scmp.eq.s32.totalorder %s24, 1
      %p183 = por %p181, %p182
      %p185 = scmp.ne.s32.totalorder %s170, %s184
      %p186 = scmp.eq.s32.totalorder %s24, 0
      %p187 = por %p185, %p186
      %s189 = sadd.s32 %s188, 1
      %p192 = scmp.eq.s32.totalorder %s18, 1
      %p193 = scmp.ne.s32.totalorder %s188, %s190
      %p194 = scmp.eq.s32.totalorder %s18, 0
      %p195 = por %p193, %p194
      %p196 = scmp.ne.s32.totalorder %s188, %s190
      %p197 = scmp.eq.s32.totalorder %s23, 1
      %p198 = por %p196, %p197
      %p199 = scmp.ne.s32.totalorder %s190, %s191
      %p200 = scmp.eq.s32.totalorder %s23, 0
      %p201 = por %p199, %p200
      %p202 = scmp.ne.s32.totalorder %s190, %s191
      %p203 = scmp.eq.s32.totalorder %s24, 1
      %p204 = por %p202, %p203
      %p206 = scmp.ne.s32.totalorder %s191, %s205
      %p207 = scmp.eq.s32.totalorder %s24, 0
      %p208 = por %p206, %p207
      %s210 = sadd.s32 %s209, 1
      %p213 = scmp.eq.s32.totalorder %s18, 1
      %p214 = scmp.ne.s32.totalorder %s209, %s211
      %p215 = scmp.eq.s32.totalorder %s18, 0
      %p216 = por %p214, %p215
      %p217 = scmp.ne.s32.totalorder %s209, %s211
      %p218 = scmp.eq.s32.totalorder %s23, 1
      %p219 = por %p217, %p218
      %p220 = scmp.ne.s32.totalorder %s211, %s212
      %p221 = scmp.eq.s32.totalorder %s23, 0
      %p222 = por %p220, %p221
      %p223 = scmp.ne.s32.totalorder %s211, %s212
      %p224 = scmp.eq.s32.totalorder %s24, 1
      %p225 = por %p223, %p224
      %p227 = scmp.ne.s32.totalorder %s212, %s226
      %p228 = scmp.eq.s32.totalorder %s24, 0
      %p229 = por %p227, %p228
      %s231 = sadd.s32 %s230, 1
      %p234 = scmp.eq.s32.totalorder %s18, 1
      %p235 = scmp.ne.s32.totalorder %s230, %s232
      %p236 = scmp.eq.s32.totalorder %s18, 0
      %p237 = por %p235, %p236
      %p238 = scmp.ne.s32.totalorder %s230, %s232
      %p239 = scmp.eq.s32.totalorder %s23, 1
      %p240 = por %p238, %p239
      %p241 = scmp.ne.s32.totalorder %s232, %s233
      %p242 = scmp.eq.s32.totalorder %s23, 0
      %p243 = por %p241, %p242
      %p244 = scmp.ne.s32.totalorder %s232, %s233
      %p245 = scmp.eq.s32.totalorder %s24, 1
      %p246 = por %p244, %p245
      %p248 = scmp.ne.s32.totalorder %s233, %s247
      %p249 = scmp.eq.s32.totalorder %s24, 0
      %p250 = por %p248, %p249
      %s251 = ssub.s32 %s18, %s25
      %p252 = scmp.eq.s32.totalorder %s251, 0
      %s254 = sadd.s32 %s253, 1
      %s255 = scalar_select %p252, %s253, %s254
      %p258 = pneg %p252
      %p259 = scmp.eq.s32.totalorder %s18, 1
      %p260 = por %p258, %p259
      %p261 = scmp.ne.s32.totalorder %s253, %s256
      %p262 = scmp.eq.s32.totalorder %s18, 0
      %p263 = por %p261, %p262
      %p264 = scmp.ne.s32.totalorder %s253, %s256
      %p265 = scmp.eq.s32.totalorder %s23, 1
      %p266 = por %p264, %p265
      %p267 = scmp.ne.s32.totalorder %s256, %s257
      %p268 = scmp.eq.s32.totalorder %s23, 0
      %p269 = por %p267, %p268
      %p270 = scmp.ne.s32.totalorder %s256, %s257
      %p271 = scmp.eq.s32.totalorder %s24, 1
      %p272 = por %p270, %p271
      %p274 = scmp.ne.s32.totalorder %s257, %s273
      %p275 = scmp.eq.s32.totalorder %s24, 0
      %p276 = por %p274, %p275
      %p277 = scmp.le.s32.totalorder 1, %s18
      %p278 = scmp.lt.s32.totalorder %s18, 3
      %p279 = pnand %p277, %p278
      %p280 = pneg %p279
      // Predicated region
      $region9: #{tpu_custom_call.1} parent=5 // pred_check
        _
      $region10: #{tpu_custom_call.1} parent=5 // pred_check_branch
        %282 = sbr.rel (%p279) target = $region12
      $region11: #{tpu_custom_call.1} parent=5 // pred_region
        %s283 = ssub.s32 %s18, 1
        // Predicated region
        $region13: #{tpu_custom_call.1} parent=11 // pred_check
          %p284 = pneg %p117
        $region14: #{tpu_custom_call.1} parent=11 // pred_check_branch
          %286 = sbr.rel (%p284) target = $region16
        $region15: #{tpu_custom_call.1} parent=11 // pred_region
          _
        $region16: #{tpu_custom_call.1} parent=11 // pred_fallthru
          _
        // Predicated region
        $region17: #{tpu_custom_call.1} parent=11 // pred_check
          %p287 = pneg %p138
        $region18: #{tpu_custom_call.1} parent=11 // pred_check_branch
          %289 = sbr.rel (%p287) target = $region20
        $region19: #{tpu_custom_call.1} parent=11 // pred_region
          _
        $region20: #{tpu_custom_call.1} parent=11 // pred_fallthru
          _
        // Predicated region
        $region21: #{tpu_custom_call.1} parent=11 // pred_check
          %p290 = pneg %p159
        $region22: #{tpu_custom_call.1} parent=11 // pred_check_branch
          %292 = sbr.rel (%p290) target = $region24
        $region23: #{tpu_custom_call.1} parent=11 // pred_region
          _
        $region24: #{tpu_custom_call.1} parent=11 // pred_fallthru
          _
        // Predicated region
        $region25: #{tpu_custom_call.1} parent=11 // pred_check
          %p293 = pneg %p180
        $region26: #{tpu_custom_call.1} parent=11 // pred_check_branch
          %295 = sbr.rel (%p293) target = $region28
        $region27: #{tpu_custom_call.1} parent=11 // pred_region
          _
        $region28: #{tpu_custom_call.1} parent=11 // pred_fallthru
          _
        // Predicated region
        $region29: #{tpu_custom_call.1} parent=11 // pred_check
          %p296 = pneg %p201
        $region30: #{tpu_custom_call.1} parent=11 // pred_check_branch
          %298 = sbr.rel (%p296) target = $region32
        $region31: #{tpu_custom_call.1} parent=11 // pred_region
          _
        $region32: #{tpu_custom_call.1} parent=11 // pred_fallthru
          _
        // Predicated region
        $region33: #{tpu_custom_call.1} parent=11 // pred_check
          %p299 = pneg %p222
        $region34: #{tpu_custom_call.1} parent=11 // pred_check_branch
          %301 = sbr.rel (%p299) target = $region36
        $region35: #{tpu_custom_call.1} parent=11 // pred_region
          _
        $region36: #{tpu_custom_call.1} parent=11 // pred_fallthru
          _
        // Predicated region
        $region37: #{tpu_custom_call.1} parent=11 // pred_check
          %p302 = pneg %p243
        $region38: #{tpu_custom_call.1} parent=11 // pred_check_branch
          %304 = sbr.rel (%p302) target = $region40
        $region39: #{tpu_custom_call.1} parent=11 // pred_region
          _
        $region40: #{tpu_custom_call.1} parent=11 // pred_fallthru
          _
      $region12: #{tpu_custom_call.1} parent=5 // pred_fallthru
        _
      %p305 = scmp.lt.s32.totalorder %s18, 2
      // Predicated region
      $region41: #{tpu_custom_call.1} parent=5 // pred_check
        %p306 = pneg %p305
      $region42: #{tpu_custom_call.1} parent=5 // pred_check_branch
        %308 = sbr.rel (%p306) target = $region44
      $region43: #{tpu_custom_call.1} parent=5 // pred_region
        // Predicated region
        $region45: #{tpu_custom_call.1} parent=43 // pred_check
          %p309 = pneg %p38
        $region46: #{tpu_custom_call.1} parent=43 // pred_check_branch
          %311 = sbr.rel (%p309) target = $region48
        $region47: #{tpu_custom_call.1} parent=43 // pred_region
          %s312 = sand.u32 %s28, 1
          %s313 = sand.u32 %s28, 1
          %s314 = smul.addr %s313, 64
          %s315 = scalar_lea.vmem [#allocation3], %s314
          %s316 = smul.addr %s18, 8
          %s317 = scalar_lea.vmem %s0, %s316
          // Predicated region
          $region49: #{tpu_custom_call.1} parent=47 // pred_check
            _
          $region50: #{tpu_custom_call.1} parent=47 // pred_check_branch
            %319 = sbr.rel (0) target = $region52
          $region51: #{tpu_custom_call.1} parent=47 // pred_region
            // Predicated region
            $region53: #{tpu_custom_call.1} parent=51 // pred_check
              _
            $region54: #{tpu_custom_call.1} parent=51 // pred_check_branch
              %321 = sbr.rel (0) target = $region56
            $region55: #{tpu_custom_call.1} parent=51 // pred_region
              // Predicated region
              $region68: #{tpu_custom_call.1} parent=55 // pred_check
                _
              $region69: #{tpu_custom_call.1} parent=55 // pred_check_branch
                %351 = sbr.rel (0) target = $region71
              $region70: #{tpu_custom_call.1} parent=55 // pred_region
                loop: start=0, step=1, limit=1
                $region72: #{tpu_custom_call.1} parent=70 // loop_pre_header
                  _
                $region73: #{tpu_custom_call.1} parent=70 // loop_header
                  %s353 = sphi 0, %s357
                  %p354 = scmp.ge.s32.totalorder %s353, 1
                  %s358 = sphi %s317, %s317
                  %s359 = sphi %s315, %s315
                $region74: #{tpu_custom_call.1} parent=70 // loop_header_branch
                  %356 = sbr.rel (%p354) target = $region78
                $region75: #{tpu_custom_call.1} parent=70 // loop_body
                  %v360 = vld [vmem:[%s358] sm:$0xff]
                  %361 = vst [vmem:[%s359] sm:$0xff] %v360
                  %v362 = vld [vmem:[%s358 + $0x10] sm:$0xff]
                  %363 = vst [vmem:[%s359 + $0x8] sm:$0xff] %v362
                  %v364 = vld [vmem:[%s358 + $0x20] sm:$0xff]
                  %365 = vst [vmem:[%s359 + $0x10] sm:$0xff] %v364
                  %v366 = vld [vmem:[%s358 + $0x30] sm:$0xff]
                  %367 = vst [vmem:[%s359 + $0x18] sm:$0xff] %v366
                  %v368 = vld [vmem:[%s358 + $0x40] sm:$0xff]
                  %369 = vst [vmem:[%s359 + $0x20] sm:$0xff] %v368
                  %v370 = vld [vmem:[%s358 + $0x50] sm:$0xff]
                  %371 = vst [vmem:[%s359 + $0x28] sm:$0xff] %v370
                  %v372 = vld [vmem:[%s358 + $0x60] sm:$0xff]
                  %373 = vst [vmem:[%s359 + $0x30] sm:$0xff] %v372
                  %v374 = vld [vmem:[%s358 + $0x70] sm:$0xff]
                  %375 = vst [vmem:[%s359 + $0x38] sm:$0xff] %v374
                $region76: #{tpu_custom_call.1} parent=70 // loop_footer
                  %s357 = sadd.s32 1, %s353
                $region77: #{tpu_custom_call.1} parent=70 // loop_footer_branch
                  %352 = sbr.rel target = $region73
                $region78: #{tpu_custom_call.1} parent=70 // loop_exit
                  _
              $region71: #{tpu_custom_call.1} parent=55 // pred_fallthru
                _
              // Predicated region
              $region79: #{tpu_custom_call.1} parent=55 // pred_check
                _
              $region80: #{tpu_custom_call.1} parent=55 // pred_check_branch
                %377 = sbr.rel target = $region82
              $region81: #{tpu_custom_call.1} parent=55 // pred_region
                _
              $region82: #{tpu_custom_call.1} parent=55 // pred_fallthru
                _
            $region56: #{tpu_custom_call.1} parent=51 // pred_fallthru
              _
            // Predicated region
            $region57: #{tpu_custom_call.1} parent=51 // pred_check
              _
            $region58: #{tpu_custom_call.1} parent=51 // pred_check_branch
              %323 = sbr.rel target = $region60
            $region59: #{tpu_custom_call.1} parent=51 // pred_region
              %s325 = ssub.s32 256, 1
              loop: start=0, step=1, limit=1
              $region61: #{tpu_custom_call.1} parent=59 // loop_pre_header
                _
              $region62: #{tpu_custom_call.1} parent=59 // loop_header
                %s327 = sphi 0, %s331
                %p328 = scmp.ge.s32.totalorder %s327, 1
                %s332 = sphi %s317, %s317
                %s333 = sphi %s315, %s315
              $region63: #{tpu_custom_call.1} parent=59 // loop_header_branch
                %330 = sbr.rel (%p328) target = $region67
              $region64: #{tpu_custom_call.1} parent=59 // loop_body
                %v334 = vld [vmem:[%s332] sm:%s325]
                %335 = vst [vmem:[%s333] sm:%s325] %v334
                %v336 = vld [vmem:[%s332 + $0x10] sm:%s325]
                %337 = vst [vmem:[%s333 + $0x8] sm:%s325] %v336
                %v338 = vld [vmem:[%s332 + $0x20] sm:%s325]
                %339 = vst [vmem:[%s333 + $0x10] sm:%s325] %v338
                %v340 = vld [vmem:[%s332 + $0x30] sm:%s325]
                %341 = vst [vmem:[%s333 + $0x18] sm:%s325] %v340
                %v342 = vld [vmem:[%s332 + $0x40] sm:%s325]
                %343 = vst [vmem:[%s333 + $0x20] sm:%s325] %v342
                %v344 = vld [vmem:[%s332 + $0x50] sm:%s325]
                %345 = vst [vmem:[%s333 + $0x28] sm:%s325] %v344
                %v346 = vld [vmem:[%s332 + $0x60] sm:%s325]
                %347 = vst [vmem:[%s333 + $0x30] sm:%s325] %v346
                %v348 = vld [vmem:[%s332 + $0x70] sm:%s325]
                %349 = vst [vmem:[%s333 + $0x38] sm:%s325] %v348
              $region65: #{tpu_custom_call.1} parent=59 // loop_footer
                %s331 = sadd.s32 1, %s327
              $region66: #{tpu_custom_call.1} parent=59 // loop_footer_branch
                %326 = sbr.rel target = $region62
              $region67: #{tpu_custom_call.1} parent=59 // loop_exit
                _
            $region60: #{tpu_custom_call.1} parent=51 // pred_fallthru
              _
          $region52: #{tpu_custom_call.1} parent=47 // pred_fallthru
            _
          %378 = vnop
        $region48: #{tpu_custom_call.1} parent=43 // pred_fallthru
          _
        // Predicated region
        $region83: #{tpu_custom_call.1} parent=43 // pred_check
          %p379 = pneg %p64
        $region84: #{tpu_custom_call.1} parent=43 // pred_check_branch
          %381 = sbr.rel (%p379) target = $region86
        $region85: #{tpu_custom_call.1} parent=43 // pred_region
          %p382 = scmp.lt.s32.totalorder %s18, 1
          %s383 = scalar_select %p382, %s18, 1
          %s384 = smul.addr %s383, 8
          %s385 = scalar_lea.vmem %s1, %s384
        $region86: #{tpu_custom_call.1} parent=43 // pred_fallthru
          _
        // Predicated region
        $region87: #{tpu_custom_call.1} parent=43 // pred_check
          %p386 = pneg %p90
        $region88: #{tpu_custom_call.1} parent=43 // pred_check_branch
          %388 = sbr.rel (%p386) target = $region90
        $region89: #{tpu_custom_call.1} parent=43 // pred_region
          %p389 = scmp.lt.s32.totalorder %s18, 1
          %s390 = scalar_select %p389, %s18, 1
          %s391 = smul.addr %s390, 8
          %s392 = scalar_lea.vmem %s2, %s391
        $region90: #{tpu_custom_call.1} parent=43 // pred_fallthru
          _
      $region44: #{tpu_custom_call.1} parent=5 // pred_fallthru
        _
      %p393 = scmp.le.s32.totalorder 1, %s18
      %p394 = scmp.lt.s32.totalorder %s18, 3
      %p395 = pnand %p393, %p394
      %p396 = pneg %p395
      // Predicated region
      $region91: #{tpu_custom_call.1} parent=5 // pred_check
        _
      $region92: #{tpu_custom_call.1} parent=5 // pred_check_branch
        %398 = sbr.rel (%p395) target = $region94
      $region93: #{tpu_custom_call.1} parent=5 // pred_region
        %s399 = ssub.s32 %s18, 1
        %s400 = sand.u32 %s31, 1
        %s401 = sand.u32 %s31, 1
        %s402 = smul.addr %s401, 64
        %s403 = scalar_lea.vmem [#allocation3], %s402
        // Predicated region
        $region95: #{tpu_custom_call.1} parent=93 // pred_check
          %p404 = pneg %p44
        $region96: #{tpu_custom_call.1} parent=93 // pred_check_branch
          %406 = sbr.rel (%p404) target = $region98
        $region97: #{tpu_custom_call.1} parent=93 // pred_region
          _
        $region98: #{tpu_custom_call.1} parent=93 // pred_fallthru
          _
        %s407 = sand.u32 %s31, 1
        %s408 = sand.u32 %s31, 1
        %s409 = smul.addr %s408, 64
        %s410 = scalar_lea.vmem [#allocation3], %s409
        %p411 = pneg %p44
        %p412 = pneg %p41
        %p413 = scmp.lt.s32.totalorder %s23, 1
        %s414 = scalar_select %p413, %s23, 1
        %s415 = smul.addr %s414, 8
        %s416 = scalar_lea.vmem %s1, %s415
        %p417 = pneg %p70
        %p418 = pneg %p67
        %p419 = scmp.lt.s32.totalorder %s23, 1
        %s420 = scalar_select %p419, %s23, 1
        %s421 = smul.addr %s420, 8
        %s422 = scalar_lea.vmem %s2, %s421
        %p423 = pneg %p96
        %p424 = pneg %p93
        %p425 = pneg %p117
        %p426 = pneg %p114
        %p427 = pneg %p138
        %p428 = pneg %p135
        %p429 = pneg %p159
        %p430 = pneg %p156
        %p431 = pneg %p180
        %p432 = pneg %p177
        %p433 = pneg %p201
        %p434 = pneg %p198
        %p435 = pneg %p222
        %p436 = pneg %p219
        %p437 = pneg %p243
        %p438 = pneg %p240
        %p439 = pneg %p269
        %p440 = pneg %p266
        %p441 = scmp.lt.s32.totalorder %s23, 1
        %s442 = scalar_select %p441, %s23, 1
        %s443 = smul.addr %s442, 8
        %s444 = scalar_lea.vmem %s10, %s443
        %p445 = scmp.lt.s32.totalorder %s23, 1
        %s446 = scalar_select %p445, %s23, 1
        %s447 = smul.addr %s446, 8
        %s448 = scalar_lea.vmem %s1, %s447
        %p449 = scmp.lt.s32.totalorder %s23, 1
        %s450 = scalar_select %p449, %s23, 1
        %s451 = smul.addr %s450, 8
        %s452 = scalar_lea.vmem %s2, %s451
        %p453 = scmp.lt.s32.totalorder %s23, 1
        %s454 = scalar_select %p453, %s23, 1
        %s455 = smul.addr %s454, 8
        %s456 = scalar_lea.vmem %s10, %s455
        %v457 = vld [vmem:[%s403] sm:$0xff]
        %v458 = vld [vmem:[%s403 + $0x8] sm:$0xff]
        %v459 = vld [vmem:[%s403 + $0x10] sm:$0xff]
        %v460 = vld [vmem:[%s403 + $0x18] sm:$0xff]
        %v461 = vld [vmem:[%s403 + $0x20] sm:$0xff]
        %v462 = vld [vmem:[%s403 + $0x28] sm:$0xff]
        %v463 = vld [vmem:[%s403 + $0x30] sm:$0xff]
        %v464 = vld [vmem:[%s403 + $0x38] sm:$0xff]
        %v465 = vld [vmem:[%s3] sm:$0x7]
        %v466 = vld [vmem:[%s5] sm:$0x1]
        %468 = vset.pattern.permute.xlu0 0
        %469 = vperm.xlu0 %468, %v457
        %v470 = vpop.permute.xlu0 %469
        %473 = vset.pattern.permute.xlu0 0
        %474 = vperm.xlu0 %473, %v458
        %v475 = vpop.permute.xlu0 %474
        %478 = vset.pattern.permute.xlu0 0
        %479 = vperm.xlu0 %478, %v459
        %v480 = vpop.permute.xlu0 %479
        %483 = vset.pattern.permute.xlu0 0
        %484 = vperm.xlu0 %483, %v460
        %v485 = vpop.permute.xlu0 %484
        %488 = vset.pattern.permute.xlu0 0
        %489 = vperm.xlu0 %488, %v461
        %v490 = vpop.permute.xlu0 %489
        %493 = vset.pattern.permute.xlu0 0
        %494 = vperm.xlu0 %493, %v462
        %v495 = vpop.permute.xlu0 %494
        %498 = vset.pattern.permute.xlu0 0
        %499 = vperm.xlu0 %498, %v463
        %v500 = vpop.permute.xlu0 %499
        %503 = vset.pattern.permute.xlu0 0
        %504 = vperm.xlu0 %503, %v464
        %v505 = vpop.permute.xlu0 %504
        %v507 = vlaneseq
        %v508 = vshrl.u32 %v507, 7
        %v509 = vsub.s32 0, %v508
        %v510 = vrot.slane %v465, %v509
        %v511 = vmul.f32 %v470, %v510
        %v512 = vmul.f32 %v475, %v510
        %v513 = vmul.f32 %v480, %v510
        %v514 = vmul.f32 %v485, %v510
        %v515 = vmul.f32 %v490, %v510
        %v516 = vmul.f32 %v495, %v510
        %v517 = vmul.f32 %v500, %v510
        %v518 = vmul.f32 %v505, %v510
        %v520 = vlaneseq
        %v521 = vshrl.u32 %v520, 7
        %v522 = vsub.s32 0, %v521
        %v523 = vrot.slane %v466, %v522
        %v525 = vadd.f32 %v523, %v511
        %v526 = vadd.f32 %v523, %v512
        %v527 = vadd.f32 %v523, %v513
        %v528 = vadd.f32 %v523, %v514
        %v529 = vadd.f32 %v523, %v515
        %v530 = vadd.f32 %v523, %v516
        %v531 = vadd.f32 %v523, %v517
        %v532 = vadd.f32 %v523, %v518
        %533 = vset.pattern.permute.xlu0 1
        %534 = vperm.xlu0 %533, %v457
        %v535 = vpop.permute.xlu0 %534
        %537 = vset.pattern.permute.xlu0 1
        %538 = vperm.xlu0 %537, %v458
        %v539 = vpop.permute.xlu0 %538
        %541 = vset.pattern.permute.xlu0 1
        %542 = vperm.xlu0 %541, %v459
        %v543 = vpop.permute.xlu0 %542
        %545 = vset.pattern.permute.xlu0 1
        %546 = vperm.xlu0 %545, %v460
        %v547 = vpop.permute.xlu0 %546
        %549 = vset.pattern.permute.xlu0 1
        %550 = vperm.xlu0 %549, %v461
        %v551 = vpop.permute.xlu0 %550
        %553 = vset.pattern.permute.xlu0 1
        %554 = vperm.xlu0 %553, %v462
        %v555 = vpop.permute.xlu0 %554
        %557 = vset.pattern.permute.xlu0 1
        %558 = vperm.xlu0 %557, %v463
        %v559 = vpop.permute.xlu0 %558
        %561 = vset.pattern.permute.xlu0 1
        %562 = vperm.xlu0 %561, %v464
        %v563 = vpop.permute.xlu0 %562
        %v565 = vlaneseq
        %v566 = vshrl.u32 %v565, 7
        %v567 = vsub.s32 1, %v566
        %v568 = vrot.slane %v465, %v567
        %v569 = vmul.f32 %v535, %v568
        %v570 = vmul.f32 %v539, %v568
        %v571 = vmul.f32 %v543, %v568
        %v572 = vmul.f32 %v547, %v568
        %v573 = vmul.f32 %v551, %v568
        %v574 = vmul.f32 %v555, %v568
        %v575 = vmul.f32 %v559, %v568
        %v576 = vmul.f32 %v563, %v568
        %v577 = vadd.f32 %v525, %v569
        %v578 = vadd.f32 %v526, %v570
        %v579 = vadd.f32 %v527, %v571
        %v580 = vadd.f32 %v528, %v572
        %v581 = vadd.f32 %v529, %v573
        %v582 = vadd.f32 %v530, %v574
        %v583 = vadd.f32 %v531, %v575
        %v584 = vadd.f32 %v532, %v576
        %585 = vset.pattern.permute.xlu0 2
        %586 = vperm.xlu0 %585, %v457
        %v587 = vpop.permute.xlu0 %586
        %589 = vset.pattern.permute.xlu0 2
        %590 = vperm.xlu0 %589, %v458
        %v591 = vpop.permute.xlu0 %590
        %593 = vset.pattern.permute.xlu0 2
        %594 = vperm.xlu0 %593, %v459
        %v595 = vpop.permute.xlu0 %594
        %597 = vset.pattern.permute.xlu0 2
        %598 = vperm.xlu0 %597, %v460
        %v599 = vpop.permute.xlu0 %598
        %601 = vset.pattern.permute.xlu0 2
        %602 = vperm.xlu0 %601, %v461
        %v603 = vpop.permute.xlu0 %602
        %605 = vset.pattern.permute.xlu0 2
        %606 = vperm.xlu0 %605, %v462
        %v607 = vpop.permute.xlu0 %606
        %609 = vset.pattern.permute.xlu0 2
        %610 = vperm.xlu0 %609, %v463
        %v611 = vpop.permute.xlu0 %610
        %613 = vset.pattern.permute.xlu0 2
        %614 = vperm.xlu0 %613, %v464
        %v615 = vpop.permute.xlu0 %614
        %v617 = vlaneseq
        %v618 = vshrl.u32 %v617, 7
        %v619 = vsub.s32 2, %v618
        %v620 = vrot.slane %v465, %v619
        %v621 = vmul.f32 %v587, %v620
        %v622 = vmul.f32 %v591, %v620
        %v623 = vmul.f32 %v595, %v620
        %v624 = vmul.f32 %v599, %v620
        %v625 = vmul.f32 %v603, %v620
        %v626 = vmul.f32 %v607, %v620
        %v627 = vmul.f32 %v611, %v620
        %v628 = vmul.f32 %v615, %v620
        %v629 = vadd.f32 %v577, %v621
        %v630 = vadd.f32 %v578, %v622
        %v631 = vadd.f32 %v579, %v623
        %v632 = vadd.f32 %v580, %v624
        %v633 = vadd.f32 %v581, %v625
        %v634 = vadd.f32 %v582, %v626
        %v635 = vadd.f32 %v583, %v627
        %v636 = vadd.f32 %v584, %v628
        %v637 = vld [vmem:[%s4] sm:$0xff]
        %v638 = vld [vmem:[%s4 + $0x8] sm:$0xff]
        %v639 = vld [vmem:[%s4 + $0x10] sm:$0xff]
        %v640 = vld [vmem:[%s4 + $0x18] sm:$0xff]
        %v641 = vld [vmem:[%s448] sm:$0xff]
        %v642 = vld [vmem:[%s452] sm:$0xff]
        %vm643 = vcmask 261120
        %v645 = vsel %vm643, %v641, 0
        %647 = vmatprep.subr.mxu0 0.0
        %648 = vmatpush1.msra.mxu0 0.0
        %649 = vmatprep.subr.mxu0 0.0
        %650 = vmatpush1.msra.mxu0 0.0
        %651 = vmatprep.subr.mxu0 0.0
        %652 = vmatpush1.msra.mxu0 0.0
        %653 = vmatprep.subr.mxu0 0.0
        %654 = vmatpush1.msra.mxu0 0.0
        %655 = vmatprep.subr.mxu0 0.0
        %656 = vmatpush1.msra.mxu0 0.0
        %657 = vmatprep.subr.mxu0 0.0
        %658 = vmatpush1.msra.mxu0 0.0
        %659 = vmatprep.subr.mxu0 0.0
        %660 = vmatpush1.msra.mxu0 0.0
        %661 = vmatprep.subr.mxu0 0.0
        %662 = vmatpush1.msra.mxu0 0.0
        %663 = vmatprep.subr.mxu0 0.0
        %664 = vmatpush1.msra.mxu0 0.0
        %665 = vmatprep.subr.mxu0 0.0
        %666 = vmatpush1.msra.mxu0 0.0
        %667 = vmatprep.subr.mxu0 0.0
        %668 = vmatpush1.msra.mxu0 0.0
        %669 = vmatprep.subr.mxu0 0.0
        %670 = vmatpush1.msra.mxu0 0.0
        %671 = vmatprep.subr.mxu0 0.0
        %672 = vmatpush1.msra.mxu0 %v640
        %673 = vmatprep.subr.mxu0 0.0
        %674 = vmatpush1.msra.mxu0 %v639
        %675 = vmatprep.subr.mxu0 0.0
        %676 = vmatpush1.msra.mxu0 %v638
        %677 = vmatprep.subr.mxu0 0.0
        %678 = vmatpush1.msra.mxu0 %v637
        %679 = vmatprep.subr.mxu0 0.0
        %680 = vmatpush2.msra.mxu0 0.0
        %681 = vmatprep.subr.mxu0 0.0
        %682 = vmatpush2.msra.mxu0 0.0
        %683 = vmatprep.subr.mxu0 0.0
        %684 = vmatpush2.msra.mxu0 0.0
        %685 = vmatprep.subr.mxu0 0.0
        %686 = vmatpush2.msra.mxu0 0.0
        %687 = vmatprep.subr.mxu0 0.0
        %688 = vmatpush2.msra.mxu0 0.0
        %689 = vmatprep.subr.mxu0 0.0
        %690 = vmatpush2.msra.mxu0 0.0
        %691 = vmatprep.subr.mxu0 0.0
        %692 = vmatpush2.msra.mxu0 0.0
        %693 = vmatprep.subr.mxu0 0.0
        %694 = vmatpush2.msra.mxu0 0.0
        %695 = vmatprep.subr.mxu0 0.0
        %696 = vmatpush2.msra.mxu0 0.0
        %697 = vmatprep.subr.mxu0 0.0
        %698 = vmatpush2.msra.mxu0 0.0
        %699 = vmatprep.subr.mxu0 0.0
        %700 = vmatpush2.msra.mxu0 0.0
        %701 = vmatprep.subr.mxu0 0.0
        %702 = vmatpush2.msra.mxu0 0.0
        %703 = vmatprep.subr.mxu0 0.0
        %704 = vmatpush2.msra.mxu0 0.0
        %705 = vmatprep.subr.mxu0 0.0
        %706 = vmatpush2.msra.mxu0 0.0
        %707 = vmatprep.subr.mxu0 0.0
        %708 = vmatpush2.msra.mxu0 0.0
        %709 = vmatprep.subr.mxu0 0.0
        %710 = vmatpush2.msra.mxu0 0.0
        %711 = vmatprep.mubr.f32.mxu0 0.0
        %712 = vmatmul.mubr.f32.gmra.mxu0 %v645
        %v713 = vpop.f32.mrf.mxu0
        %v714 = vadd.f32 0.0, %v713
        %v715 = vpop.f32.mrf.mxu0
        %716 = vdwg.mxu0
        %v717 = vadd.f32 %v629, %v714
        %v718 = vxor.u32 %v717, 2147483648
        %v719 = vmul.f32 %v718, 1.442695
        %v720 = vpow.pop %v719
        %v721 = vadd.f32 %v720, 1.0
        %v722 = vrcp.pop %v721
        %v723 = vmul.f32 1.0, %v722
        %v724 = vtanh.pop %v717
        %726 = vrot.lane.b32.xlu0 %v642, 32
        %v727 = vpop.permute.xlu0 %726
        %v729 = vmul.f32 %v723, %v727
        %731 = vrot.lane.b32.xlu0 %v724, 64
        %v732 = vpop.permute.xlu0 %731
        %v734 = vmul.f32 %v723, %v732
        %736 = vrot.lane.b32.xlu0 %v734, 32
        %v737 = vpop.permute.xlu0 %736
        %v739 = vadd.f32 %v729, %v737
        %v740 = vtanh.pop %v739
        %742 = vrot.lane.b32.xlu0 %v740, 64
        %v743 = vpop.permute.xlu0 %742
        %v745 = vmul.f32 %v723, %v743
        %747 = vrot.lane.b32.xlu0 %v745, 32
        %v748 = vpop.permute.xlu0 %747
        %v749 = vsel %vm643, %v748, 0
        %751 = vmatprep.subr.mxu0 0.0
        %752 = vmatpush1.msra.mxu0 0.0
        %753 = vmatprep.subr.mxu0 0.0
        %754 = vmatpush1.msra.mxu0 0.0
        %755 = vmatprep.subr.mxu0 0.0
        %756 = vmatpush1.msra.mxu0 0.0
        %757 = vmatprep.subr.mxu0 0.0
        %758 = vmatpush1.msra.mxu0 0.0
        %759 = vmatprep.subr.mxu0 0.0
        %760 = vmatpush1.msra.mxu0 0.0
        %761 = vmatprep.subr.mxu0 0.0
        %762 = vmatpush1.msra.mxu0 0.0
        %763 = vmatprep.subr.mxu0 0.0
        %764 = vmatpush1.msra.mxu0 0.0
        %765 = vmatprep.subr.mxu0 0.0
        %766 = vmatpush1.msra.mxu0 0.0
        %767 = vmatprep.subr.mxu0 0.0
        %768 = vmatpush1.msra.mxu0 0.0
        %769 = vmatprep.subr.mxu0 0.0
        %770 = vmatpush1.msra.mxu0 0.0
        %771 = vmatprep.subr.mxu0 0.0
        %772 = vmatpush1.msra.mxu0 0.0
        %773 = vmatprep.subr.mxu0 0.0
        %774 = vmatpush1.msra.mxu0 0.0
        %775 = vmatprep.subr.mxu0 0.0
        %776 = vmatpush1.msra.mxu0 %v640
        %777 = vmatprep.subr.mxu0 0.0
        %778 = vmatpush1.msra.mxu0 %v639
        %779 = vmatprep.subr.mxu0 0.0
        %780 = vmatpush1.msra.mxu0 %v638
        %781 = vmatprep.subr.mxu0 0.0
        %782 = vmatpush1.msra.mxu0 %v637
        %783 = vmatprep.subr.mxu0 0.0
        %784 = vmatpush2.msra.mxu0 0.0
        %785 = vmatprep.subr.mxu0 0.0
        %786 = vmatpush2.msra.mxu0 0.0
        %787 = vmatprep.subr.mxu0 0.0
        %788 = vmatpush2.msra.mxu0 0.0
        %789 = vmatprep.subr.mxu0 0.0
        %790 = vmatpush2.msra.mxu0 0.0
        %791 = vmatprep.subr.mxu0 0.0
        %792 = vmatpush2.msra.mxu0 0.0
        %793 = vmatprep.subr.mxu0 0.0
        %794 = vmatpush2.msra.mxu0 0.0
        %795 = vmatprep.subr.mxu0 0.0
        %796 = vmatpush2.msra.mxu0 0.0
        %797 = vmatprep.subr.mxu0 0.0
        %798 = vmatpush2.msra.mxu0 0.0
        %799 = vmatprep.subr.mxu0 0.0
        %800 = vmatpush2.msra.mxu0 0.0
        %801 = vmatprep.subr.mxu0 0.0
        %802 = vmatpush2.msra.mxu0 0.0
        %803 = vmatprep.subr.mxu0 0.0
        %804 = vmatpush2.msra.mxu0 0.0
        %805 = vmatprep.subr.mxu0 0.0
        %806 = vmatpush2.msra.mxu0 0.0
        %807 = vmatprep.subr.mxu0 0.0
        %808 = vmatpush2.msra.mxu0 0.0
        %809 = vmatprep.subr.mxu0 0.0
        %810 = vmatpush2.msra.mxu0 0.0
        %811 = vmatprep.subr.mxu0 0.0
        %812 = vmatpush2.msra.mxu0 0.0
        %813 = vmatprep.subr.mxu0 0.0
        %814 = vmatpush2.msra.mxu0 0.0
        %815 = vmatprep.mubr.f32.mxu0 0.0
        %816 = vmatmul.mubr.f32.gmra.mxu0 %v749
        %v817 = vpop.f32.mrf.mxu0
        %v818 = vadd.f32 0.0, %v817
        %v819 = vpop.f32.mrf.mxu0
        %820 = vdwg.mxu0
        %v821 = vadd.f32 %v630, %v818
        %v822 = vxor.u32 %v821, 2147483648
        %v823 = vmul.f32 %v822, 1.442695
        %v824 = vpow.pop %v823
        %v825 = vadd.f32 %v824, 1.0
        %v826 = vrcp.pop %v825
        %v827 = vmul.f32 1.0, %v826
        %v828 = vtanh.pop %v821
        %v829 = vmul.f32 %v827, %v739
        %831 = vrot.lane.b32.xlu0 %v828, 64
        %v832 = vpop.permute.xlu0 %831
        %v834 = vmul.f32 %v827, %v832
        %836 = vrot.lane.b32.xlu0 %v834, 32
        %v837 = vpop.permute.xlu0 %836
        %v839 = vadd.f32 %v829, %v837
        %v840 = vtanh.pop %v839
        %842 = vrot.lane.b32.xlu0 %v840, 64
        %v843 = vpop.permute.xlu0 %842
        %v845 = vmul.f32 %v827, %v843
        %847 = vrot.lane.b32.xlu0 %v845, 32
        %v848 = vpop.permute.xlu0 %847
        %v849 = vsel %vm643, %v848, 0
        %851 = vmatprep.subr.mxu0 0.0
        %852 = vmatpush1.msra.mxu0 0.0
        %853 = vmatprep.subr.mxu0 0.0
        %854 = vmatpush1.msra.mxu0 0.0
        %855 = vmatprep.subr.mxu0 0.0
        %856 = vmatpush1.msra.mxu0 0.0
        %857 = vmatprep.subr.mxu0 0.0
        %858 = vmatpush1.msra.mxu0 0.0
        %859 = vmatprep.subr.mxu0 0.0
        %860 = vmatpush1.msra.mxu0 0.0
        %861 = vmatprep.subr.mxu0 0.0
        %862 = vmatpush1.msra.mxu0 0.0
        %863 = vmatprep.subr.mxu0 0.0
        %864 = vmatpush1.msra.mxu0 0.0
        %865 = vmatprep.subr.mxu0 0.0
        %866 = vmatpush1.msra.mxu0 0.0
        %867 = vmatprep.subr.mxu0 0.0
        %868 = vmatpush1.msra.mxu0 0.0
        %869 = vmatprep.subr.mxu0 0.0
        %870 = vmatpush1.msra.mxu0 0.0
        %871 = vmatprep.subr.mxu0 0.0
        %872 = vmatpush1.msra.mxu0 0.0
        %873 = vmatprep.subr.mxu0 0.0
        %874 = vmatpush1.msra.mxu0 0.0
        %875 = vmatprep.subr.mxu0 0.0
        %876 = vmatpush1.msra.mxu0 %v640
        %877 = vmatprep.subr.mxu0 0.0
        %878 = vmatpush1.msra.mxu0 %v639
        %879 = vmatprep.subr.mxu0 0.0
        %880 = vmatpush1.msra.mxu0 %v638
        %881 = vmatprep.subr.mxu0 0.0
        %882 = vmatpush1.msra.mxu0 %v637
        %883 = vmatprep.subr.mxu0 0.0
        %884 = vmatpush2.msra.mxu0 0.0
        %885 = vmatprep.subr.mxu0 0.0
        %886 = vmatpush2.msra.mxu0 0.0
        %887 = vmatprep.subr.mxu0 0.0
        %888 = vmatpush2.msra.mxu0 0.0
        %889 = vmatprep.subr.mxu0 0.0
        %890 = vmatpush2.msra.mxu0 0.0
        %891 = vmatprep.subr.mxu0 0.0
        %892 = vmatpush2.msra.mxu0 0.0
        %893 = vmatprep.subr.mxu0 0.0
        %894 = vmatpush2.msra.mxu0 0.0
        %895 = vmatprep.subr.mxu0 0.0
        %896 = vmatpush2.msra.mxu0 0.0
        %897 = vmatprep.subr.mxu0 0.0
        %898 = vmatpush2.msra.mxu0 0.0
        %899 = vmatprep.subr.mxu0 0.0
        %900 = vmatpush2.msra.mxu0 0.0
        %901 = vmatprep.subr.mxu0 0.0
        %902 = vmatpush2.msra.mxu0 0.0
        %903 = vmatprep.subr.mxu0 0.0
        %904 = vmatpush2.msra.mxu0 0.0
        %905 = vmatprep.subr.mxu0 0.0
        %906 = vmatpush2.msra.mxu0 0.0
        %907 = vmatprep.subr.mxu0 0.0
        %908 = vmatpush2.msra.mxu0 0.0
        %909 = vmatprep.subr.mxu0 0.0
        %910 = vmatpush2.msra.mxu0 0.0
        %911 = vmatprep.subr.mxu0 0.0
        %912 = vmatpush2.msra.mxu0 0.0
        %913 = vmatprep.subr.mxu0 0.0
        %914 = vmatpush2.msra.mxu0 0.0
        %915 = vmatprep.mubr.f32.mxu0 0.0
        %916 = vmatmul.mubr.f32.gmra.mxu0 %v849
        %v917 = vpop.f32.mrf.mxu0
        %v918 = vadd.f32 0.0, %v917
        %v919 = vpop.f32.mrf.mxu0
        %920 = vdwg.mxu0
        %v921 = vadd.f32 %v631, %v918
        %v922 = vxor.u32 %v921, 2147483648
        %v923 = vmul.f32 %v922, 1.442695
        %v924 = vpow.pop %v923
        %v925 = vadd.f32 %v924, 1.0
        %v926 = vrcp.pop %v925
        %v927 = vmul.f32 1.0, %v926
        %v928 = vtanh.pop %v921
        %v929 = vmul.f32 %v927, %v839
        %931 = vrot.lane.b32.xlu0 %v928, 64
        %v932 = vpop.permute.xlu0 %931
        %v934 = vmul.f32 %v927, %v932
        %936 = vrot.lane.b32.xlu0 %v934, 32
        %v937 = vpop.permute.xlu0 %936
        %v939 = vadd.f32 %v929, %v937
        %v940 = vtanh.pop %v939
        %942 = vrot.lane.b32.xlu0 %v940, 64
        %v943 = vpop.permute.xlu0 %942
        %v945 = vmul.f32 %v927, %v943
        %947 = vrot.lane.b32.xlu0 %v945, 32
        %v948 = vpop.permute.xlu0 %947
        %v949 = vsel %vm643, %v948, 0
        %951 = vmatprep.subr.mxu0 0.0
        %952 = vmatpush1.msra.mxu0 0.0
        %953 = vmatprep.subr.mxu0 0.0
        %954 = vmatpush1.msra.mxu0 0.0
        %955 = vmatprep.subr.mxu0 0.0
        %956 = vmatpush1.msra.mxu0 0.0
        %957 = vmatprep.subr.mxu0 0.0
        %958 = vmatpush1.msra.mxu0 0.0
        %959 = vmatprep.subr.mxu0 0.0
        %960 = vmatpush1.msra.mxu0 0.0
        %961 = vmatprep.subr.mxu0 0.0
        %962 = vmatpush1.msra.mxu0 0.0
        %963 = vmatprep.subr.mxu0 0.0
        %964 = vmatpush1.msra.mxu0 0.0
        %965 = vmatprep.subr.mxu0 0.0
        %966 = vmatpush1.msra.mxu0 0.0
        %967 = vmatprep.subr.mxu0 0.0
        %968 = vmatpush1.msra.mxu0 0.0
        %969 = vmatprep.subr.mxu0 0.0
        %970 = vmatpush1.msra.mxu0 0.0
        %971 = vmatprep.subr.mxu0 0.0
        %972 = vmatpush1.msra.mxu0 0.0
        %973 = vmatprep.subr.mxu0 0.0
        %974 = vmatpush1.msra.mxu0 0.0
        %975 = vmatprep.subr.mxu0 0.0
        %976 = vmatpush1.msra.mxu0 %v640
        %977 = vmatprep.subr.mxu0 0.0
        %978 = vmatpush1.msra.mxu0 %v639
        %979 = vmatprep.subr.mxu0 0.0
        %980 = vmatpush1.msra.mxu0 %v638
        %981 = vmatprep.subr.mxu0 0.0
        %982 = vmatpush1.msra.mxu0 %v637
        %983 = vmatprep.subr.mxu0 0.0
        %984 = vmatpush2.msra.mxu0 0.0
        %985 = vmatprep.subr.mxu0 0.0
        %986 = vmatpush2.msra.mxu0 0.0
        %987 = vmatprep.subr.mxu0 0.0
        %988 = vmatpush2.msra.mxu0 0.0
        %989 = vmatprep.subr.mxu0 0.0
        %990 = vmatpush2.msra.mxu0 0.0
        %991 = vmatprep.subr.mxu0 0.0
        %992 = vmatpush2.msra.mxu0 0.0
        %993 = vmatprep.subr.mxu0 0.0
        %994 = vmatpush2.msra.mxu0 0.0
        %995 = vmatprep.subr.mxu0 0.0
        %996 = vmatpush2.msra.mxu0 0.0
        %997 = vmatprep.subr.mxu0 0.0
        %998 = vmatpush2.msra.mxu0 0.0
        %999 = vmatprep.subr.mxu0 0.0
        %1000 = vmatpush2.msra.mxu0 0.0
        %1001 = vmatprep.subr.mxu0 0.0
        %1002 = vmatpush2.msra.mxu0 0.0
        %1003 = vmatprep.subr.mxu0 0.0
        %1004 = vmatpush2.msra.mxu0 0.0
        %1005 = vmatprep.subr.mxu0 0.0
        %1006 = vmatpush2.msra.mxu0 0.0
        %1007 = vmatprep.subr.mxu0 0.0
        %1008 = vmatpush2.msra.mxu0 0.0
        %1009 = vmatprep.subr.mxu0 0.0
        %1010 = vmatpush2.msra.mxu0 0.0
        %1011 = vmatprep.subr.mxu0 0.0
        %1012 = vmatpush2.msra.mxu0 0.0
        %1013 = vmatprep.subr.mxu0 0.0
        %1014 = vmatpush2.msra.mxu0 0.0
        %1015 = vmatprep.mubr.f32.mxu0 0.0
        %1016 = vmatmul.mubr.f32.gmra.mxu0 %v949
        %v1017 = vpop.f32.mrf.mxu0
        %v1018 = vadd.f32 0.0, %v1017
        %v1019 = vpop.f32.mrf.mxu0
        %1020 = vdwg.mxu0
        %v1021 = vadd.f32 %v632, %v1018
        %v1022 = vxor.u32 %v1021, 2147483648
        %v1023 = vmul.f32 %v1022, 1.442695
        %v1024 = vpow.pop %v1023
        %v1025 = vadd.f32 %v1024, 1.0
        %v1026 = vrcp.pop %v1025
        %v1027 = vmul.f32 1.0, %v1026
        %v1028 = vtanh.pop %v1021
        %v1029 = vmul.f32 %v1027, %v939
        %1031 = vrot.lane.b32.xlu0 %v1028, 64
        %v1032 = vpop.permute.xlu0 %1031
        %v1034 = vmul.f32 %v1027, %v1032
        %1036 = vrot.lane.b32.xlu0 %v1034, 32
        %v1037 = vpop.permute.xlu0 %1036
        %v1039 = vadd.f32 %v1029, %v1037
        %v1040 = vtanh.pop %v1039
        %1042 = vrot.lane.b32.xlu0 %v1040, 64
        %v1043 = vpop.permute.xlu0 %1042
        %v1045 = vmul.f32 %v1027, %v1043
        %1047 = vrot.lane.b32.xlu0 %v1045, 32
        %v1048 = vpop.permute.xlu0 %1047
        %v1049 = vsel %vm643, %v1048, 0
        %1051 = vmatprep.subr.mxu0 0.0
        %1052 = vmatpush1.msra.mxu0 0.0
        %1053 = vmatprep.subr.mxu0 0.0
        %1054 = vmatpush1.msra.mxu0 0.0
        %1055 = vmatprep.subr.mxu0 0.0
        %1056 = vmatpush1.msra.mxu0 0.0
        %1057 = vmatprep.subr.mxu0 0.0
        %1058 = vmatpush1.msra.mxu0 0.0
        %1059 = vmatprep.subr.mxu0 0.0
        %1060 = vmatpush1.msra.mxu0 0.0
        %1061 = vmatprep.subr.mxu0 0.0
        %1062 = vmatpush1.msra.mxu0 0.0
        %1063 = vmatprep.subr.mxu0 0.0
        %1064 = vmatpush1.msra.mxu0 0.0
        %1065 = vmatprep.subr.mxu0 0.0
        %1066 = vmatpush1.msra.mxu0 0.0
        %1067 = vmatprep.subr.mxu0 0.0
        %1068 = vmatpush1.msra.mxu0 0.0
        %1069 = vmatprep.subr.mxu0 0.0
        %1070 = vmatpush1.msra.mxu0 0.0
        %1071 = vmatprep.subr.mxu0 0.0
        %1072 = vmatpush1.msra.mxu0 0.0
        %1073 = vmatprep.subr.mxu0 0.0
        %1074 = vmatpush1.msra.mxu0 0.0
        %1075 = vmatprep.subr.mxu0 0.0
        %1076 = vmatpush1.msra.mxu0 %v640
        %1077 = vmatprep.subr.mxu0 0.0
        %1078 = vmatpush1.msra.mxu0 %v639
        %1079 = vmatprep.subr.mxu0 0.0
        %1080 = vmatpush1.msra.mxu0 %v638
        %1081 = vmatprep.subr.mxu0 0.0
        %1082 = vmatpush1.msra.mxu0 %v637
        %1083 = vmatprep.subr.mxu0 0.0
        %1084 = vmatpush2.msra.mxu0 0.0
        %1085 = vmatprep.subr.mxu0 0.0
        %1086 = vmatpush2.msra.mxu0 0.0
        %1087 = vmatprep.subr.mxu0 0.0
        %1088 = vmatpush2.msra.mxu0 0.0
        %1089 = vmatprep.subr.mxu0 0.0
        %1090 = vmatpush2.msra.mxu0 0.0
        %1091 = vmatprep.subr.mxu0 0.0
        %1092 = vmatpush2.msra.mxu0 0.0
        %1093 = vmatprep.subr.mxu0 0.0
        %1094 = vmatpush2.msra.mxu0 0.0
        %1095 = vmatprep.subr.mxu0 0.0
        %1096 = vmatpush2.msra.mxu0 0.0
        %1097 = vmatprep.subr.mxu0 0.0
        %1098 = vmatpush2.msra.mxu0 0.0
        %1099 = vmatprep.subr.mxu0 0.0
        %1100 = vmatpush2.msra.mxu0 0.0
        %1101 = vmatprep.subr.mxu0 0.0
        %1102 = vmatpush2.msra.mxu0 0.0
        %1103 = vmatprep.subr.mxu0 0.0
        %1104 = vmatpush2.msra.mxu0 0.0
        %1105 = vmatprep.subr.mxu0 0.0
        %1106 = vmatpush2.msra.mxu0 0.0
        %1107 = vmatprep.subr.mxu0 0.0
        %1108 = vmatpush2.msra.mxu0 0.0
        %1109 = vmatprep.subr.mxu0 0.0
        %1110 = vmatpush2.msra.mxu0 0.0
        %1111 = vmatprep.subr.mxu0 0.0
        %1112 = vmatpush2.msra.mxu0 0.0
        %1113 = vmatprep.subr.mxu0 0.0
        %1114 = vmatpush2.msra.mxu0 0.0
        %1115 = vmatprep.mubr.f32.mxu0 0.0
        %1116 = vmatmul.mubr.f32.gmra.mxu0 %v1049
        %v1117 = vpop.f32.mrf.mxu0
        %v1118 = vadd.f32 0.0, %v1117
        %v1119 = vpop.f32.mrf.mxu0
        %1120 = vdwg.mxu0
        %v1121 = vadd.f32 %v633, %v1118
        %v1122 = vxor.u32 %v1121, 2147483648
        %v1123 = vmul.f32 %v1122, 1.442695
        %v1124 = vpow.pop %v1123
        %v1125 = vadd.f32 %v1124, 1.0
        %v1126 = vrcp.pop %v1125
        %v1127 = vmul.f32 1.0, %v1126
        %v1128 = vtanh.pop %v1121
        %v1129 = vmul.f32 %v1127, %v1039
        %1131 = vrot.lane.b32.xlu0 %v1128, 64
        %v1132 = vpop.permute.xlu0 %1131
        %v1134 = vmul.f32 %v1127, %v1132
        %1136 = vrot.lane.b32.xlu0 %v1134, 32
        %v1137 = vpop.permute.xlu0 %1136
        %v1139 = vadd.f32 %v1129, %v1137
        %v1140 = vtanh.pop %v1139
        %1142 = vrot.lane.b32.xlu0 %v1140, 64
        %v1143 = vpop.permute.xlu0 %1142
        %v1145 = vmul.f32 %v1127, %v1143
        %1147 = vrot.lane.b32.xlu0 %v1145, 32
        %v1148 = vpop.permute.xlu0 %1147
        %v1149 = vsel %vm643, %v1148, 0
        %1151 = vmatprep.subr.mxu0 0.0
        %1152 = vmatpush1.msra.mxu0 0.0
        %1153 = vmatprep.subr.mxu0 0.0
        %1154 = vmatpush1.msra.mxu0 0.0
        %1155 = vmatprep.subr.mxu0 0.0
        %1156 = vmatpush1.msra.mxu0 0.0
        %1157 = vmatprep.subr.mxu0 0.0
        %1158 = vmatpush1.msra.mxu0 0.0
        %1159 = vmatprep.subr.mxu0 0.0
        %1160 = vmatpush1.msra.mxu0 0.0
        %1161 = vmatprep.subr.mxu0 0.0
        %1162 = vmatpush1.msra.mxu0 0.0
        %1163 = vmatprep.subr.mxu0 0.0
        %1164 = vmatpush1.msra.mxu0 0.0
        %1165 = vmatprep.subr.mxu0 0.0
        %1166 = vmatpush1.msra.mxu0 0.0
        %1167 = vmatprep.subr.mxu0 0.0
        %1168 = vmatpush1.msra.mxu0 0.0
        %1169 = vmatprep.subr.mxu0 0.0
        %1170 = vmatpush1.msra.mxu0 0.0
        %1171 = vmatprep.subr.mxu0 0.0
        %1172 = vmatpush1.msra.mxu0 0.0
        %1173 = vmatprep.subr.mxu0 0.0
        %1174 = vmatpush1.msra.mxu0 0.0
        %1175 = vmatprep.subr.mxu0 0.0
        %1176 = vmatpush1.msra.mxu0 %v640
        %1177 = vmatprep.subr.mxu0 0.0
        %1178 = vmatpush1.msra.mxu0 %v639
        %1179 = vmatprep.subr.mxu0 0.0
        %1180 = vmatpush1.msra.mxu0 %v638
        %1181 = vmatprep.subr.mxu0 0.0
        %1182 = vmatpush1.msra.mxu0 %v637
        %1183 = vmatprep.subr.mxu0 0.0
        %1184 = vmatpush2.msra.mxu0 0.0
        %1185 = vmatprep.subr.mxu0 0.0
        %1186 = vmatpush2.msra.mxu0 0.0
        %1187 = vmatprep.subr.mxu0 0.0
        %1188 = vmatpush2.msra.mxu0 0.0
        %1189 = vmatprep.subr.mxu0 0.0
        %1190 = vmatpush2.msra.mxu0 0.0
        %1191 = vmatprep.subr.mxu0 0.0
        %1192 = vmatpush2.msra.mxu0 0.0
        %1193 = vmatprep.subr.mxu0 0.0
        %1194 = vmatpush2.msra.mxu0 0.0
        %1195 = vmatprep.subr.mxu0 0.0
        %1196 = vmatpush2.msra.mxu0 0.0
        %1197 = vmatprep.subr.mxu0 0.0
        %1198 = vmatpush2.msra.mxu0 0.0
        %1199 = vmatprep.subr.mxu0 0.0
        %1200 = vmatpush2.msra.mxu0 0.0
        %1201 = vmatprep.subr.mxu0 0.0
        %1202 = vmatpush2.msra.mxu0 0.0
        %1203 = vmatprep.subr.mxu0 0.0
        %1204 = vmatpush2.msra.mxu0 0.0
        %1205 = vmatprep.subr.mxu0 0.0
        %1206 = vmatpush2.msra.mxu0 0.0
        %1207 = vmatprep.subr.mxu0 0.0
        %1208 = vmatpush2.msra.mxu0 0.0
        %1209 = vmatprep.subr.mxu0 0.0
        %1210 = vmatpush2.msra.mxu0 0.0
        %1211 = vmatprep.subr.mxu0 0.0
        %1212 = vmatpush2.msra.mxu0 0.0
        %1213 = vmatprep.subr.mxu0 0.0
        %1214 = vmatpush2.msra.mxu0 0.0
        %1215 = vmatprep.mubr.f32.mxu0 0.0
        %1216 = vmatmul.mubr.f32.gmra.mxu0 %v1149
        %v1217 = vpop.f32.mrf.mxu0
        %v1218 = vadd.f32 0.0, %v1217
        %v1219 = vpop.f32.mrf.mxu0
        %1220 = vdwg.mxu0
        %v1221 = vadd.f32 %v634, %v1218
        %v1222 = vxor.u32 %v1221, 2147483648
        %v1223 = vmul.f32 %v1222, 1.442695
        %v1224 = vpow.pop %v1223
        %v1225 = vadd.f32 %v1224, 1.0
        %v1226 = vrcp.pop %v1225
        %v1227 = vmul.f32 1.0, %v1226
        %v1228 = vtanh.pop %v1221
        %v1229 = vmul.f32 %v1227, %v1139
        %1231 = vrot.lane.b32.xlu0 %v1228, 64
        %v1232 = vpop.permute.xlu0 %1231
        %v1234 = vmul.f32 %v1227, %v1232
        %1236 = vrot.lane.b32.xlu0 %v1234, 32
        %v1237 = vpop.permute.xlu0 %1236
        %v1239 = vadd.f32 %v1229, %v1237
        %v1240 = vtanh.pop %v1239
        %1242 = vrot.lane.b32.xlu0 %v1240, 64
        %v1243 = vpop.permute.xlu0 %1242
        %v1245 = vmul.f32 %v1227, %v1243
        %1247 = vrot.lane.b32.xlu0 %v1245, 32
        %v1248 = vpop.permute.xlu0 %1247
        %v1249 = vsel %vm643, %v1248, 0
        %1251 = vmatprep.subr.mxu0 0.0
        %1252 = vmatpush1.msra.mxu0 0.0
        %1253 = vmatprep.subr.mxu0 0.0
        %1254 = vmatpush1.msra.mxu0 0.0
        %1255 = vmatprep.subr.mxu0 0.0
        %1256 = vmatpush1.msra.mxu0 0.0
        %1257 = vmatprep.subr.mxu0 0.0
        %1258 = vmatpush1.msra.mxu0 0.0
        %1259 = vmatprep.subr.mxu0 0.0
        %1260 = vmatpush1.msra.mxu0 0.0
        %1261 = vmatprep.subr.mxu0 0.0
        %1262 = vmatpush1.msra.mxu0 0.0
        %1263 = vmatprep.subr.mxu0 0.0
        %1264 = vmatpush1.msra.mxu0 0.0
        %1265 = vmatprep.subr.mxu0 0.0
        %1266 = vmatpush1.msra.mxu0 0.0
        %1267 = vmatprep.subr.mxu0 0.0
        %1268 = vmatpush1.msra.mxu0 0.0
        %1269 = vmatprep.subr.mxu0 0.0
        %1270 = vmatpush1.msra.mxu0 0.0
        %1271 = vmatprep.subr.mxu0 0.0
        %1272 = vmatpush1.msra.mxu0 0.0
        %1273 = vmatprep.subr.mxu0 0.0
        %1274 = vmatpush1.msra.mxu0 0.0
        %1275 = vmatprep.subr.mxu0 0.0
        %1276 = vmatpush1.msra.mxu0 %v640
        %1277 = vmatprep.subr.mxu0 0.0
        %1278 = vmatpush1.msra.mxu0 %v639
        %1279 = vmatprep.subr.mxu0 0.0
        %1280 = vmatpush1.msra.mxu0 %v638
        %1281 = vmatprep.subr.mxu0 0.0
        %1282 = vmatpush1.msra.mxu0 %v637
        %1283 = vmatprep.subr.mxu0 0.0
        %1284 = vmatpush2.msra.mxu0 0.0
        %1285 = vmatprep.subr.mxu0 0.0
        %1286 = vmatpush2.msra.mxu0 0.0
        %1287 = vmatprep.subr.mxu0 0.0
        %1288 = vmatpush2.msra.mxu0 0.0
        %1289 = vmatprep.subr.mxu0 0.0
        %1290 = vmatpush2.msra.mxu0 0.0
        %1291 = vmatprep.subr.mxu0 0.0
        %1292 = vmatpush2.msra.mxu0 0.0
        %1293 = vmatprep.subr.mxu0 0.0
        %1294 = vmatpush2.msra.mxu0 0.0
        %1295 = vmatprep.subr.mxu0 0.0
        %1296 = vmatpush2.msra.mxu0 0.0
        %1297 = vmatprep.subr.mxu0 0.0
        %1298 = vmatpush2.msra.mxu0 0.0
        %1299 = vmatprep.subr.mxu0 0.0
        %1300 = vmatpush2.msra.mxu0 0.0
        %1301 = vmatprep.subr.mxu0 0.0
        %1302 = vmatpush2.msra.mxu0 0.0
        %1303 = vmatprep.subr.mxu0 0.0
        %1304 = vmatpush2.msra.mxu0 0.0
        %1305 = vmatprep.subr.mxu0 0.0
        %1306 = vmatpush2.msra.mxu0 0.0
        %1307 = vmatprep.subr.mxu0 0.0
        %1308 = vmatpush2.msra.mxu0 0.0
        %1309 = vmatprep.subr.mxu0 0.0
        %1310 = vmatpush2.msra.mxu0 0.0
        %1311 = vmatprep.subr.mxu0 0.0
        %1312 = vmatpush2.msra.mxu0 0.0
        %1313 = vmatprep.subr.mxu0 0.0
        %1314 = vmatpush2.msra.mxu0 0.0
        %1315 = vmatprep.mubr.f32.mxu0 0.0
        %1316 = vmatmul.mubr.f32.gmra.mxu0 %v1249
        %v1317 = vpop.f32.mrf.mxu0
        %v1318 = vadd.f32 0.0, %v1317
        %v1319 = vpop.f32.mrf.mxu0
        %1320 = vdwg.mxu0
        %v1321 = vadd.f32 %v635, %v1318
        %v1322 = vxor.u32 %v1321, 2147483648
        %v1323 = vmul.f32 %v1322, 1.442695
        %v1324 = vpow.pop %v1323
        %v1325 = vadd.f32 %v1324, 1.0
        %v1326 = vrcp.pop %v1325
        %v1327 = vmul.f32 1.0, %v1326
        %v1328 = vtanh.pop %v1321
        %v1329 = vmul.f32 %v1327, %v1239
        %1331 = vrot.lane.b32.xlu0 %v1328, 64
        %v1332 = vpop.permute.xlu0 %1331
        %v1334 = vmul.f32 %v1327, %v1332
        %1336 = vrot.lane.b32.xlu0 %v1334, 32
        %v1337 = vpop.permute.xlu0 %1336
        %v1339 = vadd.f32 %v1329, %v1337
        %v1340 = vtanh.pop %v1339
        %1342 = vrot.lane.b32.xlu0 %v1340, 64
        %v1343 = vpop.permute.xlu0 %1342
        %v1345 = vmul.f32 %v1327, %v1343
        %1347 = vrot.lane.b32.xlu0 %v1345, 32
        %v1348 = vpop.permute.xlu0 %1347
        %v1349 = vsel %vm643, %v1348, 0
        %1351 = vmatprep.subr.mxu0 0.0
        %1352 = vmatpush1.msra.mxu0 0.0
        %1353 = vmatprep.subr.mxu0 0.0
        %1354 = vmatpush1.msra.mxu0 0.0
        %1355 = vmatprep.subr.mxu0 0.0
        %1356 = vmatpush1.msra.mxu0 0.0
        %1357 = vmatprep.subr.mxu0 0.0
        %1358 = vmatpush1.msra.mxu0 0.0
        %1359 = vmatprep.subr.mxu0 0.0
        %1360 = vmatpush1.msra.mxu0 0.0
        %1361 = vmatprep.subr.mxu0 0.0
        %1362 = vmatpush1.msra.mxu0 0.0
        %1363 = vmatprep.subr.mxu0 0.0
        %1364 = vmatpush1.msra.mxu0 0.0
        %1365 = vmatprep.subr.mxu0 0.0
        %1366 = vmatpush1.msra.mxu0 0.0
        %1367 = vmatprep.subr.mxu0 0.0
        %1368 = vmatpush1.msra.mxu0 0.0
        %1369 = vmatprep.subr.mxu0 0.0
        %1370 = vmatpush1.msra.mxu0 0.0
        %1371 = vmatprep.subr.mxu0 0.0
        %1372 = vmatpush1.msra.mxu0 0.0
        %1373 = vmatprep.subr.mxu0 0.0
        %1374 = vmatpush1.msra.mxu0 0.0
        %1375 = vmatprep.subr.mxu0 0.0
        %1376 = vmatpush1.msra.mxu0 %v640
        %1377 = vmatprep.subr.mxu0 0.0
        %1378 = vmatpush1.msra.mxu0 %v639
        %1379 = vmatprep.subr.mxu0 0.0
        %1380 = vmatpush1.msra.mxu0 %v638
        %1381 = vmatprep.subr.mxu0 0.0
        %1382 = vmatpush1.msra.mxu0 %v637
        %1383 = vmatprep.subr.mxu0 0.0
        %1384 = vmatpush2.msra.mxu0 0.0
        %1385 = vmatprep.subr.mxu0 0.0
        %1386 = vmatpush2.msra.mxu0 0.0
        %1387 = vmatprep.subr.mxu0 0.0
        %1388 = vmatpush2.msra.mxu0 0.0
        %1389 = vmatprep.subr.mxu0 0.0
        %1390 = vmatpush2.msra.mxu0 0.0
        %1391 = vmatprep.subr.mxu0 0.0
        %1392 = vmatpush2.msra.mxu0 0.0
        %1393 = vmatprep.subr.mxu0 0.0
        %1394 = vmatpush2.msra.mxu0 0.0
        %1395 = vmatprep.subr.mxu0 0.0
        %1396 = vmatpush2.msra.mxu0 0.0
        %1397 = vmatprep.subr.mxu0 0.0
        %1398 = vmatpush2.msra.mxu0 0.0
        %1399 = vmatprep.subr.mxu0 0.0
        %1400 = vmatpush2.msra.mxu0 0.0
        %1401 = vmatprep.subr.mxu0 0.0
        %1402 = vmatpush2.msra.mxu0 0.0
        %1403 = vmatprep.subr.mxu0 0.0
        %1404 = vmatpush2.msra.mxu0 0.0
        %1405 = vmatprep.subr.mxu0 0.0
        %1406 = vmatpush2.msra.mxu0 0.0
        %1407 = vmatprep.subr.mxu0 0.0
        %1408 = vmatpush2.msra.mxu0 0.0
        %1409 = vmatprep.subr.mxu0 0.0
        %1410 = vmatpush2.msra.mxu0 0.0
        %1411 = vmatprep.subr.mxu0 0.0
        %1412 = vmatpush2.msra.mxu0 0.0
        %1413 = vmatprep.subr.mxu0 0.0
        %1414 = vmatpush2.msra.mxu0 0.0
        %1415 = vmatprep.mubr.f32.mxu0 0.0
        %1416 = vmatmul.mubr.f32.gmra.mxu0 %v1349
        %v1417 = vpop.f32.mrf.mxu0
        %v1418 = vadd.f32 0.0, %v1417
        %v1419 = vpop.f32.mrf.mxu0
        %1420 = vdwg.mxu0
        %v1421 = vadd.f32 %v636, %v1418
        %v1422 = vxor.u32 %v1421, 2147483648
        %v1423 = vmul.f32 %v1422, 1.442695
        %v1424 = vpow.pop %v1423
        %v1425 = vadd.f32 %v1424, 1.0
        %v1426 = vrcp.pop %v1425
        %v1427 = vmul.f32 1.0, %v1426
        %v1428 = vtanh.pop %v1421
        %v1429 = vmul.f32 %v1427, %v1339
        %1431 = vrot.lane.b32.xlu0 %v1428, 64
        %v1432 = vpop.permute.xlu0 %1431
        %v1434 = vmul.f32 %v1427, %v1432
        %1436 = vrot.lane.b32.xlu0 %v1434, 32
        %v1437 = vpop.permute.xlu0 %1436
        %v1439 = vadd.f32 %v1429, %v1437
        %v1440 = vtanh.pop %v1439
        %1442 = vrot.lane.b32.xlu0 %v1440, 64
        %v1443 = vpop.permute.xlu0 %1442
        %v1445 = vmul.f32 %v1427, %v1443
        %v1446 = vld [vmem:[%s6] sm:$0xff]
        %v1447 = vld [vmem:[%s6 + $0x8] sm:$0xff]
        %v1448 = vld [vmem:[%s6 + $0x10] sm:$0xff]
        %v1449 = vld [vmem:[%s6 + $0x18] sm:$0xff]
        %v1450 = vld [vmem:[%s7] sm:$0x1]
        %v1452 = vlaneseq
        %v1453 = vshrl.u32 %v1452, 7
        %v1454 = vsub.s32 0, %v1453
        %v1455 = vrot.slane %v1450, %v1454
        %1458 = vrot.lane.b32.xlu0 %v1445, 32
        %v1459 = vpop.permute.xlu0 %1458
        %v1460 = vsel %vm643, %v1459, 0
        %1462 = vmatprep.subr.mxu0 0.0
        %1463 = vmatpush1.msra.mxu0 0.0
        %1464 = vmatprep.subr.mxu0 0.0
        %1465 = vmatpush1.msra.mxu0 0.0
        %1466 = vmatprep.subr.mxu0 0.0
        %1467 = vmatpush1.msra.mxu0 0.0
        %1468 = vmatprep.subr.mxu0 0.0
        %1469 = vmatpush1.msra.mxu0 0.0
        %1470 = vmatprep.subr.mxu0 0.0
        %1471 = vmatpush1.msra.mxu0 0.0
        %1472 = vmatprep.subr.mxu0 0.0
        %1473 = vmatpush1.msra.mxu0 0.0
        %1474 = vmatprep.subr.mxu0 0.0
        %1475 = vmatpush1.msra.mxu0 0.0
        %1476 = vmatprep.subr.mxu0 0.0
        %1477 = vmatpush1.msra.mxu0 0.0
        %1478 = vmatprep.subr.mxu0 0.0
        %1479 = vmatpush1.msra.mxu0 0.0
        %1480 = vmatprep.subr.mxu0 0.0
        %1481 = vmatpush1.msra.mxu0 0.0
        %1482 = vmatprep.subr.mxu0 0.0
        %1483 = vmatpush1.msra.mxu0 0.0
        %1484 = vmatprep.subr.mxu0 0.0
        %1485 = vmatpush1.msra.mxu0 0.0
        %1486 = vmatprep.subr.mxu0 0.0
        %1487 = vmatpush1.msra.mxu0 %v1449
        %1488 = vmatprep.subr.mxu0 0.0
        %1489 = vmatpush1.msra.mxu0 %v1448
        %1490 = vmatprep.subr.mxu0 0.0
        %1491 = vmatpush1.msra.mxu0 %v1447
        %1492 = vmatprep.subr.mxu0 0.0
        %1493 = vmatpush1.msra.mxu0 %v1446
        %1494 = vmatprep.subr.mxu0 0.0
        %1495 = vmatpush2.msra.mxu0 0.0
        %1496 = vmatprep.subr.mxu0 0.0
        %1497 = vmatpush2.msra.mxu0 0.0
        %1498 = vmatprep.subr.mxu0 0.0
        %1499 = vmatpush2.msra.mxu0 0.0
        %1500 = vmatprep.subr.mxu0 0.0
        %1501 = vmatpush2.msra.mxu0 0.0
        %1502 = vmatprep.subr.mxu0 0.0
        %1503 = vmatpush2.msra.mxu0 0.0
        %1504 = vmatprep.subr.mxu0 0.0
        %1505 = vmatpush2.msra.mxu0 0.0
        %1506 = vmatprep.subr.mxu0 0.0
        %1507 = vmatpush2.msra.mxu0 0.0
        %1508 = vmatprep.subr.mxu0 0.0
        %1509 = vmatpush2.msra.mxu0 0.0
        %1510 = vmatprep.subr.mxu0 0.0
        %1511 = vmatpush2.msra.mxu0 0.0
        %1512 = vmatprep.subr.mxu0 0.0
        %1513 = vmatpush2.msra.mxu0 0.0
        %1514 = vmatprep.subr.mxu0 0.0
        %1515 = vmatpush2.msra.mxu0 0.0
        %1516 = vmatprep.subr.mxu0 0.0
        %1517 = vmatpush2.msra.mxu0 0.0
        %1518 = vmatprep.subr.mxu0 0.0
        %1519 = vmatpush2.msra.mxu0 0.0
        %1520 = vmatprep.subr.mxu0 0.0
        %1521 = vmatpush2.msra.mxu0 0.0
        %1522 = vmatprep.subr.mxu0 0.0
        %1523 = vmatpush2.msra.mxu0 0.0
        %1524 = vmatprep.subr.mxu0 0.0
        %1525 = vmatpush2.msra.mxu0 0.0
        %1526 = vmatprep.mubr.f32.mxu0 0.0
        %1527 = vmatmul.mubr.f32.gmra.mxu0 %v1460
        %v1528 = vpop.f32.mrf.mxu0
        %v1529 = vadd.f32 %v1455, %v1528
        %v1530 = vpop.f32.mrf.mxu0
        %1531 = vdwg.mxu0
        %v1532 = vmax.f32 %v1529, 0.0
        %v1533 = vld [vmem:[%s8] sm:$0x1]
        %v1535 = vlaneseq
        %v1536 = vshrl.u32 %v1535, 7
        %v1537 = vsub.s32 0, %v1536
        %v1538 = vrot.slane %v1533, %v1537
        %v1540 = vmul.f32 %v1532, %v1538
        %vm1541 = vcmask 195584
        %v1542 = vsel %vm1541, %v1540, 0.0
        %1543 = vadd.xlane.f32.xlu0 %v1542
        %v1544 = vpop.xlane.xlu0 %1543
        %v1545 = vld [vmem:[#allocation2] sm:$0x1]
        %v1547 = vlaneseq
        %v1548 = vshrl.u32 %v1547, 7
        %v1549 = vsub.s32 0, %v1548
        %v1550 = vrot.slane %v1545, %v1549
        %v1552 = vadd.f32 %v1544, %v1550
        %v1553 = vtanh.pop %v1552
        %vm1554 = vcmask 7168
        %1555 = vst.msk [vmem:[%s456] sm:$0xff] %vm1554, %v1553
        %p1556 = scmp.lt.s32.totalorder %s23, 1
        %s1557 = scalar_select %p1556, %s23, 1
        %s1558 = smul.addr %s1557, 8
        %s1559 = scalar_lea.vmem %s10, %s1558
        // Predicated region
        $region99: #{tpu_custom_call.1} parent=93 // pred_check
          %p1560 = pneg %p266
        $region100: #{tpu_custom_call.1} parent=93 // pred_check_branch
          %1562 = sbr.rel (%p1560) target = $region102
        $region101: #{tpu_custom_call.1} parent=93 // pred_region
          _
        $region102: #{tpu_custom_call.1} parent=93 // pred_fallthru
          _
      $region94: #{tpu_custom_call.1} parent=5 // pred_fallthru
        _
      %p1563 = scmp.le.s32.totalorder 2, %s18
      // Predicated region
      $region103: #{tpu_custom_call.1} parent=5 // pred_check
        %p1564 = pneg %p1563
      $region104: #{tpu_custom_call.1} parent=5 // pred_check_branch
        %1566 = sbr.rel (%p1564) target = $region106
      $region105: #{tpu_custom_call.1} parent=5 // pred_region
        %s1567 = ssub.s32 %s18, 2
        // Predicated region
        $region107: #{tpu_custom_call.1} parent=105 // pred_check
          %p1568 = pneg %p272
        $region108: #{tpu_custom_call.1} parent=105 // pred_check_branch
          %1570 = sbr.rel (%p1568) target = $region110
        $region109: #{tpu_custom_call.1} parent=105 // pred_region
          %p1571 = scmp.lt.s32.totalorder %s24, 1
          %s1572 = scalar_select %p1571, %s24, 1
          %s1573 = smul.addr %s1572, 8
          %s1574 = scalar_lea.vmem %s10, %s1573
        $region110: #{tpu_custom_call.1} parent=105 // pred_fallthru
          _
      $region106: #{tpu_custom_call.1} parent=5 // pred_fallthru
        _
    $region6: #{tpu_custom_call.1} parent=1 // loop_footer
      %s22 = sadd.s32 1, %s18
    $region7: #{tpu_custom_call.1} parent=1 // loop_footer_branch
      %17 = sbr.rel target = $region3
    $region8: #{tpu_custom_call.1} parent=1 // loop_exit
      _

</llo_original>
